<compile_context>
chip_gen: v7x
topology: tpu7x:2x2x1
jax: 0.10.0
libtpu: 0.0.40
codegen_flags: <defaults>
</compile_context>

<pallas_src>
import numpy as np

import jax
import jax.numpy as jnp
from jax import lax
from jax.experimental import pallas as pl
from jax.experimental.pallas import tpu as pltpu


# ------------------------------ fused kernel ---------------------------------
def make_fused_kernel(n_layers, seq, b_pad, unroll):
    """Kernel computing all RNN layers + decoder in one grid step.

    Ref layout (positional):
      x2d, h0, [wih_t, whh_t, b] * n_layers, dec_wt, dec_b,   (inputs)
      dec_out, h_out,                                          (outputs)
      act_scr                                                  (VMEM scratch)
    """

    def kernel(*refs):
        x_ref, h0_ref = refs[0], refs[1]
        w_refs = refs[2:2 + 3 * n_layers]
        dec_wt_ref = refs[2 + 3 * n_layers]
        dec_b_ref = refs[3 + 3 * n_layers]
        out_ref = refs[4 + 3 * n_layers]
        hout_ref = refs[5 + 3 * n_layers]
        act_scr = refs[6 + 3 * n_layers]          # merged pre/act buffer

        for l in range(n_layers):
            wih_t_ref = w_refs[3 * l + 0]         # (in_size, hid_pad)
            whh_t_ref = w_refs[3 * l + 1]         # (hid_pad, hid_pad)
            b_ref = w_refs[3 * l + 2]             # (1, hid_pad) = b_ih + b_hh

            # Hoisted input projection for ALL time steps at once, written into the
            # same buffer the recurrence will update in place:
            #   pre = layer_in @ W_ih^T + (b_ih + b_hh),  M = seq * b_pad
            layer_in = x_ref[...] if l == 0 else act_scr[...]
            act_scr[...] = (
                jnp.dot(layer_in, wih_t_ref[...],
                        preferred_element_type=jnp.float32)
                + b_ref[...])

            # Hoist the recurrent weight load out of the serial loop.
            whh_t = whh_t_ref[...]

            # Serial time recurrence: h carried in vregs (fori_loop carry), only the
            # activation is stored; no VMEM round trip of h on the critical path.
            def step(t, h):
                row = pl.multiple_of(t * b_pad, b_pad)
                pre_t = act_scr[pl.ds(row, b_pad), :]            # (b_pad, hid_pad)
                h_new = jnp.maximum(
                    pre_t + jnp.dot(h, whh_t,
                                    preferred_element_type=jnp.float32),
                    0.0)
                act_scr[pl.ds(row, b_pad), :] = h_new            # in-place overwrite
                return h_new

            h_fin = lax.fori_loop(0, seq, step, h0_ref[l], unroll=unroll)

            # Final hidden of this layer, written once from the carry.
            hout_ref[l] = h_fin

        # Decoder on the last layer's full activation (lane-dense padded output).
        out_ref[...] = (
            jnp.dot(act_scr[...], dec_wt_ref[...],
                    preferred_element_type=jnp.float32)
            + dec_b_ref[...])

    return kernel


def _full_spec(shape):
    n = len(shape)
    return pl.BlockSpec(shape, lambda i, _n=n: (0,) * _n)


def _padded_vmem_bytes(shape, itemsize=4):
    """Bytes for one VMEM-resident f32 buffer, rounded to (8,128) tiles."""
    if len(shape) == 1:
        lead, r, c = 1, 1, shape[0]
    else:
        lead = int(np.prod(shape[:-2])) if len(shape) > 2 else 1
        r, c = shape[-2], shape[-1]
    r_p = ((r + 7) // 8) * 8
    c_p = ((c + 127) // 128) * 128
    return lead * r_p * c_p * itemsize


# ------------------------------- full forward --------------------------------
def darrnn_forward(params, x, hidden):
    """Matches DARRNN.forward (use_lstm=False, eval-mode dropout = identity).

    x:      (seq, batch, utt_size)   time-major (PyTorch nn.RNN default)
    hidden: (n_layers, batch, hidden_size)
    returns (seq, batch, n_tags), (n_layers, batch, hidden_size)
    """
    seq, batch, utt = x.shape
    n_layers = len(params["rnn"])
    hid = params["rnn"][0][1].shape[0]
    n_tags = params["dec_w"].shape[0]

    b_pad = ((batch + 7) // 8) * 8            # sublane multiple (f32)
    h_pad = ((hid + 127) // 128) * 128        # lane-dense hidden dim
    nt_pad = ((n_tags + 127) // 128) * 128    # lane-dense decoder output

    # Pad batch + hidden, flatten time into the M dimension.
    x_p = jnp.pad(x, ((0, 0), (0, b_pad - batch), (0, 0)))
    h0_p = jnp.pad(hidden, ((0, 0), (0, b_pad - batch), (0, h_pad - hid)))
    x2d = x_p.reshape(seq * b_pad, utt)

    # Pre-transpose weights, fuse the two RNN biases, zero-pad hidden/output lanes.
    flat_w = []
    for l, (w_ih, w_hh, b_ih, b_hh) in enumerate(params["rnn"]):
        in_dim = utt if l == 0 else h_pad
        wih_t = jnp.pad(w_ih.T, ((0, in_dim - w_ih.shape[1]), (0, h_pad - hid)))
        whh_t = jnp.pad(w_hh.T, ((0, h_pad - hid), (0, h_pad - hid)))
        b = jnp.pad(b_ih + b_hh, (0, h_pad - hid)).reshape(1, h_pad)
        flat_w += [wih_t, whh_t, b]
    dec_wt = jnp.pad(params["dec_w"].T, ((0, h_pad - hid), (0, nt_pad - n_tags)))
    dec_b = jnp.pad(params["dec_b"], (0, nt_pad - n_tags)).reshape(1, nt_pad)

    unroll = max(1, min(seq, 8))              # bounded unroll of the time loop
    kernel = make_fused_kernel(n_layers, seq, b_pad, unroll)

    in_arrays = [x2d, h0_p] + flat_w + [dec_wt, dec_b]
    in_specs = [_full_spec(a.shape) for a in in_arrays]

    out_shapes = [(seq * b_pad, nt_pad), (n_layers, b_pad, h_pad)]
    scratch_shape = (seq * b_pad, h_pad)

    # Explicit VMEM budget: in/out buffers (double-buffered by the pipeline) +
    # scratch, with a generous safety margin; clamped to a safe range for all gens.
    io_bytes = sum(_padded_vmem_bytes(a.shape) for a in in_arrays)
    io_bytes += sum(_padded_vmem_bytes(s) for s in out_shapes)
    footprint = 2 * (2 * io_bytes) + _padded_vmem_bytes(scratch_shape)
    vmem_limit = int(min(max(footprint, 8 << 20), 48 << 20))

    dec_out, h_out = pl.pallas_call(
        kernel,
        out_shape=(
            jax.ShapeDtypeStruct(out_shapes[0], jnp.float32),
            jax.ShapeDtypeStruct(out_shapes[1], jnp.float32),
        ),
        grid_spec=pltpu.PrefetchScalarGridSpec(
            num_scalar_prefetch=0,
            grid=(1,),
            in_specs=in_specs,
            out_specs=[
                _full_spec(out_shapes[0]),
                _full_spec(out_shapes[1]),
            ],
            scratch_shapes=[
                pltpu.VMEM(scratch_shape, jnp.float32),   # merged pre/act buffer
            ],
        ),
        compiler_params=pltpu.CompilerParams(
            dimension_semantics=("arbitrary",),
            vmem_limit_bytes=vmem_limit),
    )(*in_arrays)

    out = dec_out.reshape(seq, b_pad, nt_pad)[:, :batch, :n_tags]
    h_fin = h_out[:, :batch, :hid]
    return out, h_fin


# --------------------------- deterministic params ----------------------------
def init_params(key, utt_size, n_tags, hidden_size, n_layers):
    stdv = 1.0 / jnp.sqrt(jnp.float32(hidden_size))  # PyTorch nn.RNN default init
    rnn_params = []
    for l in range(n_layers):
        in_size = utt_size if l == 0 else hidden_size
        key, k1, k2, k3, k4 = jax.random.split(key, 5)
        w_ih = jax.random.uniform(k1, (hidden_size, in_size), jnp.float32, -stdv, stdv)
        w_hh = jax.random.uniform(k2, (hidden_size, hidden_size), jnp.float32, -stdv, stdv)
        b_ih = jax.random.uniform(k3, (hidden_size,), jnp.float32, -stdv, stdv)
        b_hh = jax.random.uniform(k4, (hidden_size,), jnp.float32, -stdv, stdv)
        rnn_params.append((w_ih, w_hh, b_ih, b_hh))
    key, kd = jax.random.split(key)
    dec_w = jax.random.uniform(kd, (n_tags, hidden_size), jnp.float32, -0.1, 0.1)
    dec_b = jnp.zeros((n_tags,), jnp.float32)  # decoder.bias.zero_()
    return {"rnn": rnn_params, "dec_w": dec_w, "dec_b": dec_b}


# ----------------------------- pure-JAX reference ----------------------------
def ref_forward(params, x, hidden):
    seq = x.shape[0]
    layer_in = x
    h_finals = []
    for l, (w_ih, w_hh, b_ih, b_hh) in enumerate(params["rnn"]):
        h = hidden[l]
        outs = []
        for t in range(seq):
            h = jnp.maximum(layer_in[t] @ w_ih.T + b_ih + h @ w_hh.T + b_hh, 0.0)
            outs.append(h)
        layer_in = jnp.stack(outs, axis=0)
        h_finals.append(h)
    seqL, batch, hid = layer_in.shape
    dec = layer_in.reshape(seqL * batch, hid) @ params["dec_w"].T + params["dec_b"]
    return dec.reshape(seqL, batch, -1), jnp.stack(h_finals, axis=0)


if __name__ == "__main__":
    utt_size, n_tags, hidden_size, n_layers = 32, 16, 32, 2
    seq_len, batch = 8, 2

    key = jax.random.PRNGKey(0)
    key, kx = jax.random.split(key)
    params = init_params(key, utt_size, n_tags, hidden_size, n_layers)

    x = jax.random.normal(kx, (seq_len, batch, utt_size), jnp.float32)
    h0 = jnp.zeros((n_layers, batch, hidden_size), jnp.float32)  # init_hidden

    out, h_out = darrnn_forward(params, x, h0)
    out = jax.block_until_ready(out)
    h_out = jax.block_until_ready(h_out)

    ref_out, ref_h = ref_forward(params, x, h0)
    assert out.shape == (seq_len, batch, n_tags)
    assert h_out.shape == (n_layers, batch, hidden_size)
    assert jnp.allclose(out, ref_out, atol=1e-5, rtol=1e-5)
    assert jnp.allclose(h_out, ref_h, atol=1e-5, rtol=1e-5)

    print("KERNEL_OK")
</pallas_src>

<mosaic_0001>
module attributes {stable_mosaic.version = 11 : i64} {
  func.func @kernel(%arg0: i32, %arg1: memref<64x32xf32, #tpu.memory_space<vmem>>, %arg2: memref<2x8x128xf32, #tpu.memory_space<vmem>>, %arg3: memref<32x128xf32, #tpu.memory_space<vmem>>, %arg4: memref<128x128xf32, #tpu.memory_space<vmem>>, %arg5: memref<1x128xf32, #tpu.memory_space<vmem>>, %arg6: memref<128x128xf32, #tpu.memory_space<vmem>>, %arg7: memref<128x128xf32, #tpu.memory_space<vmem>>, %arg8: memref<1x128xf32, #tpu.memory_space<vmem>>, %arg9: memref<128x128xf32, #tpu.memory_space<vmem>>, %arg10: memref<1x128xf32, #tpu.memory_space<vmem>>, %arg11: memref<64x128xf32, #tpu.memory_space<vmem>>, %arg12: memref<2x8x128xf32, #tpu.memory_space<vmem>>, %arg13: memref<64x128xf32, #tpu.memory_space<vmem>>) attributes {dimension_semantics = [#tpu.dimension_semantics<arbitrary>], iteration_bounds = array<i64: 1>, scalar_prefetch = 0 : i64, scratch_operands = 1 : i64, tpu.core_type = #tpu.core_type<tc>, window_params = [{pipeline_mode = #tpu.pipeline_mode<synchronous>, transform_indices = @transform_0, window_bounds = array<i64: 64, 32>}, {pipeline_mode = #tpu.pipeline_mode<synchronous>, transform_indices = @transform_1, window_bounds = array<i64: 2, 8, 128>}, {pipeline_mode = #tpu.pipeline_mode<synchronous>, transform_indices = @transform_2, window_bounds = array<i64: 32, 128>}, {pipeline_mode = #tpu.pipeline_mode<synchronous>, transform_indices = @transform_3, window_bounds = array<i64: 128, 128>}, {pipeline_mode = #tpu.pipeline_mode<synchronous>, transform_indices = @transform_4, window_bounds = array<i64: 1, 128>}, {pipeline_mode = #tpu.pipeline_mode<synchronous>, transform_indices = @transform_5, window_bounds = array<i64: 128, 128>}, {pipeline_mode = #tpu.pipeline_mode<synchronous>, transform_indices = @transform_6, window_bounds = array<i64: 128, 128>}, {pipeline_mode = #tpu.pipeline_mode<synchronous>, transform_indices = @transform_7, window_bounds = array<i64: 1, 128>}, {pipeline_mode = #tpu.pipeline_mode<synchronous>, transform_indices = @transform_8, window_bounds = array<i64: 128, 128>}, {pipeline_mode = #tpu.pipeline_mode<synchronous>, transform_indices = @transform_9, window_bounds = array<i64: 1, 128>}, {pipeline_mode = #tpu.pipeline_mode<synchronous>, transform_indices = @transform_10, window_bounds = array<i64: 64, 128>}, {pipeline_mode = #tpu.pipeline_mode<synchronous>, transform_indices = @transform_11, window_bounds = array<i64: 2, 8, 128>}]} {
    %c0 = arith.constant 0 : index
    %c0_0 = arith.constant 0 : index
    %0 = vector.load %arg1[%c0, %c0_0] : memref<64x32xf32, #tpu.memory_space<vmem>>, vector<64x32xf32>
    %c0_1 = arith.constant 0 : index
    %c0_2 = arith.constant 0 : index
    %1 = vector.load %arg3[%c0_1, %c0_2] : memref<32x128xf32, #tpu.memory_space<vmem>>, vector<32x128xf32>
    %cst = arith.constant dense<0.000000e+00> : vector<64x128xf32>
    %2 = tpu.matmul %0, %1, %cst {dimension_numbers = #tpu.dot_dimension_numbers<[1], [0], [0], [1], [0, 0, 1, 1], [], []>} : vector<64x32xf32>, vector<32x128xf32>, vector<64x128xf32> -> vector<64x128xf32>
    %c0_3 = arith.constant 0 : index
    %c0_4 = arith.constant 0 : index
    %3 = vector.load %arg5[%c0_3, %c0_4] : memref<1x128xf32, #tpu.memory_space<vmem>>, vector<1x128xf32>
    %4 = vector.broadcast %3 : vector<1x128xf32> to vector<64x128xf32>
    %5 = arith.addf %2, %4 : vector<64x128xf32>
    %c0_5 = arith.constant 0 : index
    %c0_6 = arith.constant 0 : index
    %6 = vector.load %arg13[%c0_5, %c0_6] : memref<64x128xf32, #tpu.memory_space<vmem>>, vector<64x128xf32>
    tpu.vector_store %arg13[%c0_5, %c0_6], %5 {strides = array<i32>} : memref<64x128xf32, #tpu.memory_space<vmem>>, vector<64x128xf32>,
    %c0_7 = arith.constant 0 : index
    %c0_8 = arith.constant 0 : index
    %7 = vector.load %arg4[%c0_7, %c0_8] : memref<128x128xf32, #tpu.memory_space<vmem>>, vector<128x128xf32>
    %c0_9 = arith.constant 0 : index
    %c0_10 = arith.constant 0 : index
    %c0_11 = arith.constant 0 : index
    %8 = vector.load %arg2[%c0_9, %c0_10, %c0_11] : memref<2x8x128xf32, #tpu.memory_space<vmem>>, vector<1x8x128xf32>
    %9 = vector.shape_cast %8 : vector<1x8x128xf32> to vector<8x128xf32>
    %c0_i32 = arith.constant 0 : i32
    %c8_i32 = arith.constant 8 : i32
    %10 = arith.muli %c0_i32, %c8_i32 : i32
    %11 = tpu.assume_multiple %10, 8 : i32
    %12 = arith.index_cast %11 : i32 to index
    %c0_12 = arith.constant 0 : index
    %13 = vector.load %arg13[%12, %c0_12] : memref<64x128xf32, #tpu.memory_space<vmem>>, vector<8x128xf32>
    %cst_13 = arith.constant dense<0.000000e+00> : vector<8x128xf32>
    %14 = tpu.matmul %9, %7, %cst_13 {dimension_numbers = #tpu.dot_dimension_numbers<[1], [0], [0], [1], [0, 0, 1, 1], [], []>} : vector<8x128xf32>, vector<128x128xf32>, vector<8x128xf32> -> vector<8x128xf32>
    %15 = arith.addf %13, %14 : vector<8x128xf32>
    %cst_14 = arith.constant 0.000000e+00 : f32
    %16 = vector.broadcast %cst_14 : f32 to vector<8x128xf32>
    %17 = arith.maximumf %15, %16 : vector<8x128xf32>
    %18 = arith.index_cast %11 : i32 to index
    %c0_15 = arith.constant 0 : index
    %19 = vector.load %arg13[%18, %c0_15] : memref<64x128xf32, #tpu.memory_space<vmem>>, vector<8x128xf32>
    tpu.vector_store %arg13[%18, %c0_15], %17 {strides = array<i32>} : memref<64x128xf32, #tpu.memory_space<vmem>>, vector<8x128xf32>,
    %c1_i32 = arith.constant 1 : i32
    %c8_i32_16 = arith.constant 8 : i32
    %20 = arith.muli %c1_i32, %c8_i32_16 : i32
    %21 = tpu.assume_multiple %20, 8 : i32
    %22 = arith.index_cast %21 : i32 to index
    %c0_17 = arith.constant 0 : index
    %23 = vector.load %arg13[%22, %c0_17] : memref<64x128xf32, #tpu.memory_space<vmem>>, vector<8x128xf32>
    %cst_18 = arith.constant dense<0.000000e+00> : vector<8x128xf32>
    %24 = tpu.matmul %17, %7, %cst_18 {dimension_numbers = #tpu.dot_dimension_numbers<[1], [0], [0], [1], [0, 0, 1, 1], [], []>} : vector<8x128xf32>, vector<128x128xf32>, vector<8x128xf32> -> vector<8x128xf32>
    %25 = arith.addf %23, %24 : vector<8x128xf32>
    %cst_19 = arith.constant 0.000000e+00 : f32
    %26 = vector.broadcast %cst_19 : f32 to vector<8x128xf32>
    %27 = arith.maximumf %25, %26 : vector<8x128xf32>
    %28 = arith.index_cast %21 : i32 to index
    %c0_20 = arith.constant 0 : index
    %29 = vector.load %arg13[%28, %c0_20] : memref<64x128xf32, #tpu.memory_space<vmem>>, vector<8x128xf32>
    tpu.vector_store %arg13[%28, %c0_20], %27 {strides = array<i32>} : memref<64x128xf32, #tpu.memory_space<vmem>>, vector<8x128xf32>,
    %c2_i32 = arith.constant 2 : i32
    %c8_i32_21 = arith.constant 8 : i32
    %30 = arith.muli %c2_i32, %c8_i32_21 : i32
    %31 = tpu.assume_multiple %30, 8 : i32
    %32 = arith.index_cast %31 : i32 to index
    %c0_22 = arith.constant 0 : index
    %33 = vector.load %arg13[%32, %c0_22] : memref<64x128xf32, #tpu.memory_space<vmem>>, vector<8x128xf32>
    %cst_23 = arith.constant dense<0.000000e+00> : vector<8x128xf32>
    %34 = tpu.matmul %27, %7, %cst_23 {dimension_numbers = #tpu.dot_dimension_numbers<[1], [0], [0], [1], [0, 0, 1, 1], [], []>} : vector<8x128xf32>, vector<128x128xf32>, vector<8x128xf32> -> vector<8x128xf32>
    %35 = arith.addf %33, %34 : vector<8x128xf32>
    %cst_24 = arith.constant 0.000000e+00 : f32
    %36 = vector.broadcast %cst_24 : f32 to vector<8x128xf32>
    %37 = arith.maximumf %35, %36 : vector<8x128xf32>
    %38 = arith.index_cast %31 : i32 to index
    %c0_25 = arith.constant 0 : index
    %39 = vector.load %arg13[%38, %c0_25] : memref<64x128xf32, #tpu.memory_space<vmem>>, vector<8x128xf32>
    tpu.vector_store %arg13[%38, %c0_25], %37 {strides = array<i32>} : memref<64x128xf32, #tpu.memory_space<vmem>>, vector<8x128xf32>,
    %c3_i32 = arith.constant 3 : i32
    %c8_i32_26 = arith.constant 8 : i32
    %40 = arith.muli %c3_i32, %c8_i32_26 : i32
    %41 = tpu.assume_multiple %40, 8 : i32
    %42 = arith.index_cast %41 : i32 to index
    %c0_27 = arith.constant 0 : index
    %43 = vector.load %arg13[%42, %c0_27] : memref<64x128xf32, #tpu.memory_space<vmem>>, vector<8x128xf32>
    %cst_28 = arith.constant dense<0.000000e+00> : vector<8x128xf32>
    %44 = tpu.matmul %37, %7, %cst_28 {dimension_numbers = #tpu.dot_dimension_numbers<[1], [0], [0], [1], [0, 0, 1, 1], [], []>} : vector<8x128xf32>, vector<128x128xf32>, vector<8x128xf32> -> vector<8x128xf32>
    %45 = arith.addf %43, %44 : vector<8x128xf32>
    %cst_29 = arith.constant 0.000000e+00 : f32
    %46 = vector.broadcast %cst_29 : f32 to vector<8x128xf32>
    %47 = arith.maximumf %45, %46 : vector<8x128xf32>
    %48 = arith.index_cast %41 : i32 to index
    %c0_30 = arith.constant 0 : index
    %49 = vector.load %arg13[%48, %c0_30] : memref<64x128xf32, #tpu.memory_space<vmem>>, vector<8x128xf32>
    tpu.vector_store %arg13[%48, %c0_30], %47 {strides = array<i32>} : memref<64x128xf32, #tpu.memory_space<vmem>>, vector<8x128xf32>,
    %c4_i32 = arith.constant 4 : i32
    %c8_i32_31 = arith.constant 8 : i32
    %50 = arith.muli %c4_i32, %c8_i32_31 : i32
    %51 = tpu.assume_multiple %50, 8 : i32
    %52 = arith.index_cast %51 : i32 to index
    %c0_32 = arith.constant 0 : index
    %53 = vector.load %arg13[%52, %c0_32] : memref<64x128xf32, #tpu.memory_space<vmem>>, vector<8x128xf32>
    %cst_33 = arith.constant dense<0.000000e+00> : vector<8x128xf32>
    %54 = tpu.matmul %47, %7, %cst_33 {dimension_numbers = #tpu.dot_dimension_numbers<[1], [0], [0], [1], [0, 0, 1, 1], [], []>} : vector<8x128xf32>, vector<128x128xf32>, vector<8x128xf32> -> vector<8x128xf32>
    %55 = arith.addf %53, %54 : vector<8x128xf32>
    %cst_34 = arith.constant 0.000000e+00 : f32
    %56 = vector.broadcast %cst_34 : f32 to vector<8x128xf32>
    %57 = arith.maximumf %55, %56 : vector<8x128xf32>
    %58 = arith.index_cast %51 : i32 to index
    %c0_35 = arith.constant 0 : index
    %59 = vector.load %arg13[%58, %c0_35] : memref<64x128xf32, #tpu.memory_space<vmem>>, vector<8x128xf32>
    tpu.vector_store %arg13[%58, %c0_35], %57 {strides = array<i32>} : memref<64x128xf32, #tpu.memory_space<vmem>>, vector<8x128xf32>,
    %c5_i32 = arith.constant 5 : i32
    %c8_i32_36 = arith.constant 8 : i32
    %60 = arith.muli %c5_i32, %c8_i32_36 : i32
    %61 = tpu.assume_multiple %60, 8 : i32
    %62 = arith.index_cast %61 : i32 to index
    %c0_37 = arith.constant 0 : index
    %63 = vector.load %arg13[%62, %c0_37] : memref<64x128xf32, #tpu.memory_space<vmem>>, vector<8x128xf32>
    %cst_38 = arith.constant dense<0.000000e+00> : vector<8x128xf32>
    %64 = tpu.matmul %57, %7, %cst_38 {dimension_numbers = #tpu.dot_dimension_numbers<[1], [0], [0], [1], [0, 0, 1, 1], [], []>} : vector<8x128xf32>, vector<128x128xf32>, vector<8x128xf32> -> vector<8x128xf32>
    %65 = arith.addf %63, %64 : vector<8x128xf32>
    %cst_39 = arith.constant 0.000000e+00 : f32
    %66 = vector.broadcast %cst_39 : f32 to vector<8x128xf32>
    %67 = arith.maximumf %65, %66 : vector<8x128xf32>
    %68 = arith.index_cast %61 : i32 to index
    %c0_40 = arith.constant 0 : index
    %69 = vector.load %arg13[%68, %c0_40] : memref<64x128xf32, #tpu.memory_space<vmem>>, vector<8x128xf32>
    tpu.vector_store %arg13[%68, %c0_40], %67 {strides = array<i32>} : memref<64x128xf32, #tpu.memory_space<vmem>>, vector<8x128xf32>,
    %c6_i32 = arith.constant 6 : i32
    %c8_i32_41 = arith.constant 8 : i32
    %70 = arith.muli %c6_i32, %c8_i32_41 : i32
    %71 = tpu.assume_multiple %70, 8 : i32
    %72 = arith.index_cast %71 : i32 to index
    %c0_42 = arith.constant 0 : index
    %73 = vector.load %arg13[%72, %c0_42] : memref<64x128xf32, #tpu.memory_space<vmem>>, vector<8x128xf32>
    %cst_43 = arith.constant dense<0.000000e+00> : vector<8x128xf32>
    %74 = tpu.matmul %67, %7, %cst_43 {dimension_numbers = #tpu.dot_dimension_numbers<[1], [0], [0], [1], [0, 0, 1, 1], [], []>} : vector<8x128xf32>, vector<128x128xf32>, vector<8x128xf32> -> vector<8x128xf32>
    %75 = arith.addf %73, %74 : vector<8x128xf32>
    %cst_44 = arith.constant 0.000000e+00 : f32
    %76 = vector.broadcast %cst_44 : f32 to vector<8x128xf32>
    %77 = arith.maximumf %75, %76 : vector<8x128xf32>
    %78 = arith.index_cast %71 : i32 to index
    %c0_45 = arith.constant 0 : index
    %79 = vector.load %arg13[%78, %c0_45] : memref<64x128xf32, #tpu.memory_space<vmem>>, vector<8x128xf32>
    tpu.vector_store %arg13[%78, %c0_45], %77 {strides = array<i32>} : memref<64x128xf32, #tpu.memory_space<vmem>>, vector<8x128xf32>,
    %c7_i32 = arith.constant 7 : i32
    %c8_i32_46 = arith.constant 8 : i32
    %80 = arith.muli %c7_i32, %c8_i32_46 : i32
    %81 = tpu.assume_multiple %80, 8 : i32
    %82 = arith.index_cast %81 : i32 to index
    %c0_47 = arith.constant 0 : index
    %83 = vector.load %arg13[%82, %c0_47] : memref<64x128xf32, #tpu.memory_space<vmem>>, vector<8x128xf32>
    %cst_48 = arith.constant dense<0.000000e+00> : vector<8x128xf32>
    %84 = tpu.matmul %77, %7, %cst_48 {dimension_numbers = #tpu.dot_dimension_numbers<[1], [0], [0], [1], [0, 0, 1, 1], [], []>} : vector<8x128xf32>, vector<128x128xf32>, vector<8x128xf32> -> vector<8x128xf32>
    %85 = arith.addf %83, %84 : vector<8x128xf32>
    %cst_49 = arith.constant 0.000000e+00 : f32
    %86 = vector.broadcast %cst_49 : f32 to vector<8x128xf32>
    %87 = arith.maximumf %85, %86 : vector<8x128xf32>
    %88 = arith.index_cast %81 : i32 to index
    %c0_50 = arith.constant 0 : index
    %89 = vector.load %arg13[%88, %c0_50] : memref<64x128xf32, #tpu.memory_space<vmem>>, vector<8x128xf32>
    tpu.vector_store %arg13[%88, %c0_50], %87 {strides = array<i32>} : memref<64x128xf32, #tpu.memory_space<vmem>>, vector<8x128xf32>,
    %c8_i32_51 = arith.constant 8 : i32
    %c0_52 = arith.constant 0 : index
    %c0_53 = arith.constant 0 : index
    %c0_54 = arith.constant 0 : index
    %90 = vector.load %arg12[%c0_52, %c0_53, %c0_54] : memref<2x8x128xf32, #tpu.memory_space<vmem>>, vector<1x8x128xf32>
    %91 = vector.shape_cast %90 : vector<1x8x128xf32> to vector<8x128xf32>
    %92 = vector.shape_cast %87 : vector<8x128xf32> to vector<1x8x128xf32>
    tpu.vector_store %arg12[%c0_52, %c0_53, %c0_54], %92 {strides = array<i32>} : memref<2x8x128xf32, #tpu.memory_space<vmem>>, vector<1x8x128xf32>,
    %c0_55 = arith.constant 0 : index
    %c0_56 = arith.constant 0 : index
    %93 = vector.load %arg13[%c0_55, %c0_56] : memref<64x128xf32, #tpu.memory_space<vmem>>, vector<64x128xf32>
    %c0_57 = arith.constant 0 : index
    %c0_58 = arith.constant 0 : index
    %94 = vector.load %arg6[%c0_57, %c0_58] : memref<128x128xf32, #tpu.memory_space<vmem>>, vector<128x128xf32>
    %cst_59 = arith.constant dense<0.000000e+00> : vector<64x128xf32>
    %95 = tpu.matmul %93, %94, %cst_59 {dimension_numbers = #tpu.dot_dimension_numbers<[1], [0], [0], [1], [0, 0, 1, 1], [], []>} : vector<64x128xf32>, vector<128x128xf32>, vector<64x128xf32> -> vector<64x128xf32>
    %c0_60 = arith.constant 0 : index
    %c0_61 = arith.constant 0 : index
    %96 = vector.load %arg8[%c0_60, %c0_61] : memref<1x128xf32, #tpu.memory_space<vmem>>, vector<1x128xf32>
    %97 = vector.broadcast %96 : vector<1x128xf32> to vector<64x128xf32>
    %98 = arith.addf %95, %97 : vector<64x128xf32>
    %c0_62 = arith.constant 0 : index
    %c0_63 = arith.constant 0 : index
    %99 = vector.load %arg13[%c0_62, %c0_63] : memref<64x128xf32, #tpu.memory_space<vmem>>, vector<64x128xf32>
    tpu.vector_store %arg13[%c0_62, %c0_63], %98 {strides = array<i32>} : memref<64x128xf32, #tpu.memory_space<vmem>>, vector<64x128xf32>,
    %c0_64 = arith.constant 0 : index
    %c0_65 = arith.constant 0 : index
    %100 = vector.load %arg7[%c0_64, %c0_65] : memref<128x128xf32, #tpu.memory_space<vmem>>, vector<128x128xf32>
    %c1 = arith.constant 1 : index
    %c0_66 = arith.constant 0 : index
    %c0_67 = arith.constant 0 : index
    %101 = vector.load %arg2[%c1, %c0_66, %c0_67] : memref<2x8x128xf32, #tpu.memory_space<vmem>>, vector<1x8x128xf32>
    %102 = vector.shape_cast %101 : vector<1x8x128xf32> to vector<8x128xf32>
    %c0_i32_68 = arith.constant 0 : i32
    %c8_i32_69 = arith.constant 8 : i32
    %103 = arith.muli %c0_i32_68, %c8_i32_69 : i32
    %104 = tpu.assume_multiple %103, 8 : i32
    %105 = arith.index_cast %104 : i32 to index
    %c0_70 = arith.constant 0 : index
    %106 = vector.load %arg13[%105, %c0_70] : memref<64x128xf32, #tpu.memory_space<vmem>>, vector<8x128xf32>
    %cst_71 = arith.constant dense<0.000000e+00> : vector<8x128xf32>
    %107 = tpu.matmul %102, %100, %cst_71 {dimension_numbers = #tpu.dot_dimension_numbers<[1], [0], [0], [1], [0, 0, 1, 1], [], []>} : vector<8x128xf32>, vector<128x128xf32>, vector<8x128xf32> -> vector<8x128xf32>
    %108 = arith.addf %106, %107 : vector<8x128xf32>
    %cst_72 = arith.constant 0.000000e+00 : f32
    %109 = vector.broadcast %cst_72 : f32 to vector<8x128xf32>
    %110 = arith.maximumf %108, %109 : vector<8x128xf32>
    %111 = arith.index_cast %104 : i32 to index
    %c0_73 = arith.constant 0 : index
    %112 = vector.load %arg13[%111, %c0_73] : memref<64x128xf32, #tpu.memory_space<vmem>>, vector<8x128xf32>
    tpu.vector_store %arg13[%111, %c0_73], %110 {strides = array<i32>} : memref<64x128xf32, #tpu.memory_space<vmem>>, vector<8x128xf32>,
    %c1_i32_74 = arith.constant 1 : i32
    %c8_i32_75 = arith.constant 8 : i32
    %113 = arith.muli %c1_i32_74, %c8_i32_75 : i32
    %114 = tpu.assume_multiple %113, 8 : i32
    %115 = arith.index_cast %114 : i32 to index
    %c0_76 = arith.constant 0 : index
    %116 = vector.load %arg13[%115, %c0_76] : memref<64x128xf32, #tpu.memory_space<vmem>>, vector<8x128xf32>
    %cst_77 = arith.constant dense<0.000000e+00> : vector<8x128xf32>
    %117 = tpu.matmul %110, %100, %cst_77 {dimension_numbers = #tpu.dot_dimension_numbers<[1], [0], [0], [1], [0, 0, 1, 1], [], []>} : vector<8x128xf32>, vector<128x128xf32>, vector<8x128xf32> -> vector<8x128xf32>
    %118 = arith.addf %116, %117 : vector<8x128xf32>
    %cst_78 = arith.constant 0.000000e+00 : f32
    %119 = vector.broadcast %cst_78 : f32 to vector<8x128xf32>
    %120 = arith.maximumf %118, %119 : vector<8x128xf32>
    %121 = arith.index_cast %114 : i32 to index
    %c0_79 = arith.constant 0 : index
    %122 = vector.load %arg13[%121, %c0_79] : memref<64x128xf32, #tpu.memory_space<vmem>>, vector<8x128xf32>
    tpu.vector_store %arg13[%121, %c0_79], %120 {strides = array<i32>} : memref<64x128xf32, #tpu.memory_space<vmem>>, vector<8x128xf32>,
    %c2_i32_80 = arith.constant 2 : i32
    %c8_i32_81 = arith.constant 8 : i32
    %123 = arith.muli %c2_i32_80, %c8_i32_81 : i32
    %124 = tpu.assume_multiple %123, 8 : i32
    %125 = arith.index_cast %124 : i32 to index
    %c0_82 = arith.constant 0 : index
    %126 = vector.load %arg13[%125, %c0_82] : memref<64x128xf32, #tpu.memory_space<vmem>>, vector<8x128xf32>
    %cst_83 = arith.constant dense<0.000000e+00> : vector<8x128xf32>
    %127 = tpu.matmul %120, %100, %cst_83 {dimension_numbers = #tpu.dot_dimension_numbers<[1], [0], [0], [1], [0, 0, 1, 1], [], []>} : vector<8x128xf32>, vector<128x128xf32>, vector<8x128xf32> -> vector<8x128xf32>
    %128 = arith.addf %126, %127 : vector<8x128xf32>
    %cst_84 = arith.constant 0.000000e+00 : f32
    %129 = vector.broadcast %cst_84 : f32 to vector<8x128xf32>
    %130 = arith.maximumf %128, %129 : vector<8x128xf32>
    %131 = arith.index_cast %124 : i32 to index
    %c0_85 = arith.constant 0 : index
    %132 = vector.load %arg13[%131, %c0_85] : memref<64x128xf32, #tpu.memory_space<vmem>>, vector<8x128xf32>
    tpu.vector_store %arg13[%131, %c0_85], %130 {strides = array<i32>} : memref<64x128xf32, #tpu.memory_space<vmem>>, vector<8x128xf32>,
    %c3_i32_86 = arith.constant 3 : i32
    %c8_i32_87 = arith.constant 8 : i32
    %133 = arith.muli %c3_i32_86, %c8_i32_87 : i32
    %134 = tpu.assume_multiple %133, 8 : i32
    %135 = arith.index_cast %134 : i32 to index
    %c0_88 = arith.constant 0 : index
    %136 = vector.load %arg13[%135, %c0_88] : memref<64x128xf32, #tpu.memory_space<vmem>>, vector<8x128xf32>
    %cst_89 = arith.constant dense<0.000000e+00> : vector<8x128xf32>
    %137 = tpu.matmul %130, %100, %cst_89 {dimension_numbers = #tpu.dot_dimension_numbers<[1], [0], [0], [1], [0, 0, 1, 1], [], []>} : vector<8x128xf32>, vector<128x128xf32>, vector<8x128xf32> -> vector<8x128xf32>
    %138 = arith.addf %136, %137 : vector<8x128xf32>
    %cst_90 = arith.constant 0.000000e+00 : f32
    %139 = vector.broadcast %cst_90 : f32 to vector<8x128xf32>
    %140 = arith.maximumf %138, %139 : vector<8x128xf32>
    %141 = arith.index_cast %134 : i32 to index
    %c0_91 = arith.constant 0 : index
    %142 = vector.load %arg13[%141, %c0_91] : memref<64x128xf32, #tpu.memory_space<vmem>>, vector<8x128xf32>
    tpu.vector_store %arg13[%141, %c0_91], %140 {strides = array<i32>} : memref<64x128xf32, #tpu.memory_space<vmem>>, vector<8x128xf32>,
    %c4_i32_92 = arith.constant 4 : i32
    %c8_i32_93 = arith.constant 8 : i32
    %143 = arith.muli %c4_i32_92, %c8_i32_93 : i32
    %144 = tpu.assume_multiple %143, 8 : i32
    %145 = arith.index_cast %144 : i32 to index
    %c0_94 = arith.constant 0 : index
    %146 = vector.load %arg13[%145, %c0_94] : memref<64x128xf32, #tpu.memory_space<vmem>>, vector<8x128xf32>
    %cst_95 = arith.constant dense<0.000000e+00> : vector<8x128xf32>
    %147 = tpu.matmul %140, %100, %cst_95 {dimension_numbers = #tpu.dot_dimension_numbers<[1], [0], [0], [1], [0, 0, 1, 1], [], []>} : vector<8x128xf32>, vector<128x128xf32>, vector<8x128xf32> -> vector<8x128xf32>
    %148 = arith.addf %146, %147 : vector<8x128xf32>
    %cst_96 = arith.constant 0.000000e+00 : f32
    %149 = vector.broadcast %cst_96 : f32 to vector<8x128xf32>
    %150 = arith.maximumf %148, %149 : vector<8x128xf32>
    %151 = arith.index_cast %144 : i32 to index
    %c0_97 = arith.constant 0 : index
    %152 = vector.load %arg13[%151, %c0_97] : memref<64x128xf32, #tpu.memory_space<vmem>>, vector<8x128xf32>
    tpu.vector_store %arg13[%151, %c0_97], %150 {strides = array<i32>} : memref<64x128xf32, #tpu.memory_space<vmem>>, vector<8x128xf32>,
    %c5_i32_98 = arith.constant 5 : i32
    %c8_i32_99 = arith.constant 8 : i32
    %153 = arith.muli %c5_i32_98, %c8_i32_99 : i32
    %154 = tpu.assume_multiple %153, 8 : i32
    %155 = arith.index_cast %154 : i32 to index
    %c0_100 = arith.constant 0 : index
    %156 = vector.load %arg13[%155, %c0_100] : memref<64x128xf32, #tpu.memory_space<vmem>>, vector<8x128xf32>
    %cst_101 = arith.constant dense<0.000000e+00> : vector<8x128xf32>
    %157 = tpu.matmul %150, %100, %cst_101 {dimension_numbers = #tpu.dot_dimension_numbers<[1], [0], [0], [1], [0, 0, 1, 1], [], []>} : vector<8x128xf32>, vector<128x128xf32>, vector<8x128xf32> -> vector<8x128xf32>
    %158 = arith.addf %156, %157 : vector<8x128xf32>
    %cst_102 = arith.constant 0.000000e+00 : f32
    %159 = vector.broadcast %cst_102 : f32 to vector<8x128xf32>
    %160 = arith.maximumf %158, %159 : vector<8x128xf32>
    %161 = arith.index_cast %154 : i32 to index
    %c0_103 = arith.constant 0 : index
    %162 = vector.load %arg13[%161, %c0_103] : memref<64x128xf32, #tpu.memory_space<vmem>>, vector<8x128xf32>
    tpu.vector_store %arg13[%161, %c0_103], %160 {strides = array<i32>} : memref<64x128xf32, #tpu.memory_space<vmem>>, vector<8x128xf32>,
    %c6_i32_104 = arith.constant 6 : i32
    %c8_i32_105 = arith.constant 8 : i32
    %163 = arith.muli %c6_i32_104, %c8_i32_105 : i32
    %164 = tpu.assume_multiple %163, 8 : i32
    %165 = arith.index_cast %164 : i32 to index
    %c0_106 = arith.constant 0 : index
    %166 = vector.load %arg13[%165, %c0_106] : memref<64x128xf32, #tpu.memory_space<vmem>>, vector<8x128xf32>
    %cst_107 = arith.constant dense<0.000000e+00> : vector<8x128xf32>
    %167 = tpu.matmul %160, %100, %cst_107 {dimension_numbers = #tpu.dot_dimension_numbers<[1], [0], [0], [1], [0, 0, 1, 1], [], []>} : vector<8x128xf32>, vector<128x128xf32>, vector<8x128xf32> -> vector<8x128xf32>
    %168 = arith.addf %166, %167 : vector<8x128xf32>
    %cst_108 = arith.constant 0.000000e+00 : f32
    %169 = vector.broadcast %cst_108 : f32 to vector<8x128xf32>
    %170 = arith.maximumf %168, %169 : vector<8x128xf32>
    %171 = arith.index_cast %164 : i32 to index
    %c0_109 = arith.constant 0 : index
    %172 = vector.load %arg13[%171, %c0_109] : memref<64x128xf32, #tpu.memory_space<vmem>>, vector<8x128xf32>
    tpu.vector_store %arg13[%171, %c0_109], %170 {strides = array<i32>} : memref<64x128xf32, #tpu.memory_space<vmem>>, vector<8x128xf32>,
    %c7_i32_110 = arith.constant 7 : i32
    %c8_i32_111 = arith.constant 8 : i32
    %173 = arith.muli %c7_i32_110, %c8_i32_111 : i32
    %174 = tpu.assume_multiple %173, 8 : i32
    %175 = arith.index_cast %174 : i32 to index
    %c0_112 = arith.constant 0 : index
    %176 = vector.load %arg13[%175, %c0_112] : memref<64x128xf32, #tpu.memory_space<vmem>>, vector<8x128xf32>
    %cst_113 = arith.constant dense<0.000000e+00> : vector<8x128xf32>
    %177 = tpu.matmul %170, %100, %cst_113 {dimension_numbers = #tpu.dot_dimension_numbers<[1], [0], [0], [1], [0, 0, 1, 1], [], []>} : vector<8x128xf32>, vector<128x128xf32>, vector<8x128xf32> -> vector<8x128xf32>
    %178 = arith.addf %176, %177 : vector<8x128xf32>
    %cst_114 = arith.constant 0.000000e+00 : f32
    %179 = vector.broadcast %cst_114 : f32 to vector<8x128xf32>
    %180 = arith.maximumf %178, %179 : vector<8x128xf32>
    %181 = arith.index_cast %174 : i32 to index
    %c0_115 = arith.constant 0 : index
    %182 = vector.load %arg13[%181, %c0_115] : memref<64x128xf32, #tpu.memory_space<vmem>>, vector<8x128xf32>
    tpu.vector_store %arg13[%181, %c0_115], %180 {strides = array<i32>} : memref<64x128xf32, #tpu.memory_space<vmem>>, vector<8x128xf32>,
    %c8_i32_116 = arith.constant 8 : i32
    %c1_117 = arith.constant 1 : index
    %c0_118 = arith.constant 0 : index
    %c0_119 = arith.constant 0 : index
    %183 = vector.load %arg12[%c1_117, %c0_118, %c0_119] : memref<2x8x128xf32, #tpu.memory_space<vmem>>, vector<1x8x128xf32>
    %184 = vector.shape_cast %183 : vector<1x8x128xf32> to vector<8x128xf32>
    %185 = vector.shape_cast %180 : vector<8x128xf32> to vector<1x8x128xf32>
    tpu.vector_store %arg12[%c1_117, %c0_118, %c0_119], %185 {strides = array<i32>} : memref<2x8x128xf32, #tpu.memory_space<vmem>>, vector<1x8x128xf32>,
    %c0_120 = arith.constant 0 : index
    %c0_121 = arith.constant 0 : index
    %186 = vector.load %arg13[%c0_120, %c0_121] : memref<64x128xf32, #tpu.memory_space<vmem>>, vector<64x128xf32>
    %c0_122 = arith.constant 0 : index
    %c0_123 = arith.constant 0 : index
    %187 = vector.load %arg9[%c0_122, %c0_123] : memref<128x128xf32, #tpu.memory_space<vmem>>, vector<128x128xf32>
    %cst_124 = arith.constant dense<0.000000e+00> : vector<64x128xf32>
    %188 = tpu.matmul %186, %187, %cst_124 {dimension_numbers = #tpu.dot_dimension_numbers<[1], [0], [0], [1], [0, 0, 1, 1], [], []>} : vector<64x128xf32>, vector<128x128xf32>, vector<64x128xf32> -> vector<64x128xf32>
    %c0_125 = arith.constant 0 : index
    %c0_126 = arith.constant 0 : index
    %189 = vector.load %arg10[%c0_125, %c0_126] : memref<1x128xf32, #tpu.memory_space<vmem>>, vector<1x128xf32>
    %190 = vector.broadcast %189 : vector<1x128xf32> to vector<64x128xf32>
    %191 = arith.addf %188, %190 : vector<64x128xf32>
    %c0_127 = arith.constant 0 : index
    %c0_128 = arith.constant 0 : index
    %192 = vector.load %arg11[%c0_127, %c0_128] : memref<64x128xf32, #tpu.memory_space<vmem>>, vector<64x128xf32>
    tpu.vector_store %arg11[%c0_127, %c0_128], %191 {strides = array<i32>} : memref<64x128xf32, #tpu.memory_space<vmem>>, vector<64x128xf32>,
    return
  }
  func.func @transform_0(%arg0: i32) -> (i32, i32) {
    %c0_i32 = arith.constant 0 : i32
    %c0_i32_0 = arith.constant 0 : i32
    %c0_i32_1 = arith.constant 0 : i32
    return %c0_i32, %c0_i32_0 : i32, i32
  }
  func.func @transform_1(%arg0: i32) -> (i32, i32, i32) {
    %c0_i32 = arith.constant 0 : i32
    %c0_i32_0 = arith.constant 0 : i32
    %c0_i32_1 = arith.constant 0 : i32
    %c0_i32_2 = arith.constant 0 : i32
    return %c0_i32, %c0_i32_0, %c0_i32_1 : i32, i32, i32
  }
  func.func @transform_2(%arg0: i32) -> (i32, i32) {
    %c0_i32 = arith.constant 0 : i32
    %c0_i32_0 = arith.constant 0 : i32
    %c0_i32_1 = arith.constant 0 : i32
    return %c0_i32, %c0_i32_0 : i32, i32
  }
  func.func @transform_3(%arg0: i32) -> (i32, i32) {
    %c0_i32 = arith.constant 0 : i32
    %c0_i32_0 = arith.constant 0 : i32
    %c0_i32_1 = arith.constant 0 : i32
    return %c0_i32, %c0_i32_0 : i32, i32
  }
  func.func @transform_4(%arg0: i32) -> (i32, i32) {
    %c0_i32 = arith.constant 0 : i32
    %c0_i32_0 = arith.constant 0 : i32
    %c0_i32_1 = arith.constant 0 : i32
    return %c0_i32, %c0_i32_0 : i32, i32
  }
  func.func @transform_5(%arg0: i32) -> (i32, i32) {
    %c0_i32 = arith.constant 0 : i32
    %c0_i32_0 = arith.constant 0 : i32
    %c0_i32_1 = arith.constant 0 : i32
    return %c0_i32, %c0_i32_0 : i32, i32
  }
  func.func @transform_6(%arg0: i32) -> (i32, i32) {
    %c0_i32 = arith.constant 0 : i32
    %c0_i32_0 = arith.constant 0 : i32
    %c0_i32_1 = arith.constant 0 : i32
    return %c0_i32, %c0_i32_0 : i32, i32
  }
  func.func @transform_7(%arg0: i32) -> (i32, i32) {
    %c0_i32 = arith.constant 0 : i32
    %c0_i32_0 = arith.constant 0 : i32
    %c0_i32_1 = arith.constant 0 : i32
    return %c0_i32, %c0_i32_0 : i32, i32
  }
  func.func @transform_8(%arg0: i32) -> (i32, i32) {
    %c0_i32 = arith.constant 0 : i32
    %c0_i32_0 = arith.constant 0 : i32
    %c0_i32_1 = arith.constant 0 : i32
    return %c0_i32, %c0_i32_0 : i32, i32
  }
  func.func @transform_9(%arg0: i32) -> (i32, i32) {
    %c0_i32 = arith.constant 0 : i32
    %c0_i32_0 = arith.constant 0 : i32
    %c0_i32_1 = arith.constant 0 : i32
    return %c0_i32, %c0_i32_0 : i32, i32
  }
  func.func @transform_10(%arg0: i32) -> (i32, i32) {
    %c0_i32 = arith.constant 0 : i32
    %c0_i32_0 = arith.constant 0 : i32
    %c0_i32_1 = arith.constant 0 : i32
    return %c0_i32, %c0_i32_0 : i32, i32
  }
  func.func @transform_11(%arg0: i32) -> (i32, i32, i32) {
    %c0_i32 = arith.constant 0 : i32
    %c0_i32_0 = arith.constant 0 : i32
    %c0_i32_1 = arith.constant 0 : i32
    %c0_i32_2 = arith.constant 0 : i32
    return %c0_i32, %c0_i32_0, %c0_i32_1 : i32, i32, i32
  }
}

</mosaic_0001>

<llo_original>
// kernel: tpu_custom_call.1
$region0: #{tpu_custom_call.1}
  #allocation0 [shape = 'u32[]', space=smem, size = 0x4, offset = 0x4, fixed_abs, tag = 'smem constant byte address 0x4 - core index']
  #allocation1 [shape = 'u32[144,128]{1,0:T(1,128)}', space=vmem, size = 0x12000, scoped, tag = 'internal scratch']
  #allocation2 [shape = 'f32[64,128]{1,0:T(8,128)}', space=vmem, size = 0x8000, scoped, tag = 'scratch operand']
  %s0 = inlined_call_operand.vmem [shape: f32[64,32], index: 0, kind: input, shape index: {}]
  %s1 = inlined_call_operand.vmem [shape: f32[2,8,128], index: 1, kind: input, shape index: {}]
  %s2 = inlined_call_operand.vmem [shape: f32[32,128], index: 2, kind: input, shape index: {}]
  %s3 = inlined_call_operand.hbm [shape: f32[128,128], index: 3, kind: input, shape index: {}]
  %s4 = inlined_call_operand.vmem [shape: f32[1,128], index: 4, kind: input, shape index: {}]
  %s5 = inlined_call_operand.hbm [shape: f32[128,128], index: 5, kind: input, shape index: {}]
  %s6 = inlined_call_operand.hbm [shape: f32[128,128], index: 6, kind: input, shape index: {}]
  %s7 = inlined_call_operand.vmem [shape: f32[1,128], index: 7, kind: input, shape index: {}]
  %s8 = inlined_call_operand.hbm [shape: f32[128,128], index: 8, kind: input, shape index: {}]
  %s9 = inlined_call_operand.vmem [shape: f32[1,128], index: 9, kind: input, shape index: {}]
  %s10 = inlined_call_operand.hbm [shape: f32[64,128], index: 10, kind: output, shape index: {0}]
  %s11 = inlined_call_operand.hbm [shape: f32[2,8,128], index: 11, kind: output, shape index: {1}]
  %12 = xla_tuple %s10, %s11
  %s13 = sld [smem:[#allocation0]]
  $region74: #{tpu_custom_call.1} parent=0
    _
  %s15 = ssub.s32 1, %s13
  %s16 = scalar_select 0, %s15, %s13
  $region1: #{tpu_custom_call.1} parent=0
    #allocation3 [shape = 'u8[65536]{0}', space=vmem, size = 0x10000, scoped, tag = 'input window, operand 3, single buffered']
    #allocation4 [shape = 's32[1]{0}', space=sflag, size = 0x4, scoped, tag = 'scoped memory for tpu_custom_call.1']
    #allocation5 [shape = 's32[1]{0}', space=sflag, size = 0x4, scoped, tag = 'scoped memory for tpu_custom_call.1']
    #allocation6 [shape = 'u8[65536]{0}', space=vmem, size = 0x10000, scoped, tag = 'input window, operand 5, single buffered']
    #allocation7 [shape = 's32[1]{0}', space=sflag, size = 0x4, scoped, tag = 'scoped memory for tpu_custom_call.1']
    #allocation8 [shape = 'u8[65536]{0}', space=vmem, size = 0x10000, scoped, tag = 'input window, operand 6, single buffered']
    #allocation9 [shape = 'u8[65536]{0}', space=vmem, size = 0x10000, scoped, tag = 'input window, operand 8, single buffered']
    #allocation10 [shape = 's32[1]{0}', space=sflag, size = 0x4, scoped, tag = 'scoped memory for tpu_custom_call.1']
    #allocation11 [shape = 'u8[32768]{0}', space=vmem, size = 0x8000, scoped, tag = 'output window, operand 0, single buffered']
    #allocation12 [shape = 'u8[8192]{0}', space=vmem, size = 0x2000, scoped, tag = 'output window, operand 1, single buffered']
    #allocation13 [shape = 's32[1]{0}', space=sflag, size = 0x4, scoped, tag = 'scoped memory for tpu_custom_call.1']
    %17 = vsyncpa [#allocation4], 0
    %18 = vsyncpa [#allocation7], 0
    %19 = vsyncpa [#allocation10], 0
    %20 = vsyncpa [#allocation5], 0
    %21 = vsyncpa [#allocation13], 0
    // Predicated region
    $region2: #{tpu_custom_call.1} parent=1 // pred_check
      _
    $region3: #{tpu_custom_call.1} parent=1 // pred_check_branch
      %23 = sbr.rel (0) target = $region5
    $region4: #{tpu_custom_call.1} parent=1 // pred_region
      _
    $region5: #{tpu_custom_call.1} parent=1 // pred_fallthru
      _
    // Predicated region
    $region6: #{tpu_custom_call.1} parent=1 // pred_check
      _
    $region7: #{tpu_custom_call.1} parent=1 // pred_check_branch
      %25 = sbr.rel (0) target = $region9
    $region8: #{tpu_custom_call.1} parent=1 // pred_region
      _
    $region9: #{tpu_custom_call.1} parent=1 // pred_fallthru
      _
    // Predicated region
    $region10: #{tpu_custom_call.1} parent=1 // pred_check
      _
    $region11: #{tpu_custom_call.1} parent=1 // pred_check_branch
      %27 = sbr.rel (0) target = $region13
    $region12: #{tpu_custom_call.1} parent=1 // pred_region
      _
    $region13: #{tpu_custom_call.1} parent=1 // pred_fallthru
      _
    // Predicated region
    $region14: #{tpu_custom_call.1} parent=1 // pred_check
      _
    $region15: #{tpu_custom_call.1} parent=1 // pred_check_branch
      %29 = sbr.rel (0) target = $region17
    $region16: #{tpu_custom_call.1} parent=1 // pred_region
      %s31 = ssub.s32 2048, 2048
      %32 = vsyncadd [#allocation4], %s31
      %s33 = sshll.u32 [#allocation3], 4
      %s34 = int_to_ptr.vmem [resolvable:$true] %s33
      %39 = dma.hbm_to_vmem [thread:$0]  %s3, 2048, %s34, [#allocation4], 128, 128, 8
    $region17: #{tpu_custom_call.1} parent=1 // pred_fallthru
      _
    // Predicated region
    $region18: #{tpu_custom_call.1} parent=1 // pred_check
      _
    $region19: #{tpu_custom_call.1} parent=1 // pred_check_branch
      %41 = sbr.rel (0) target = $region21
    $region20: #{tpu_custom_call.1} parent=1 // pred_region
      _
    $region21: #{tpu_custom_call.1} parent=1 // pred_fallthru
      _
    // Predicated region
    $region22: #{tpu_custom_call.1} parent=1 // pred_check
      _
    $region23: #{tpu_custom_call.1} parent=1 // pred_check_branch
      %43 = sbr.rel (0) target = $region25
    $region24: #{tpu_custom_call.1} parent=1 // pred_region
      %s45 = ssub.s32 2048, 2048
      %46 = vsyncadd [#allocation7], %s45
      %s47 = sshll.u32 [#allocation6], 4
      %s48 = int_to_ptr.vmem [resolvable:$true] %s47
      %53 = dma.hbm_to_vmem [thread:$0]  %s5, 2048, %s48, [#allocation7], 128, 128, 8
    $region25: #{tpu_custom_call.1} parent=1 // pred_fallthru
      _
    // Predicated region
    $region26: #{tpu_custom_call.1} parent=1 // pred_check
      _
    $region27: #{tpu_custom_call.1} parent=1 // pred_check_branch
      %55 = sbr.rel (0) target = $region29
    $region28: #{tpu_custom_call.1} parent=1 // pred_region
      %s57 = ssub.s32 2048, 2048
      %58 = vsyncadd [#allocation7], %s57
      %s59 = sshll.u32 [#allocation8], 4
      %s60 = int_to_ptr.vmem [resolvable:$true] %s59
      %65 = dma.hbm_to_vmem [thread:$0]  %s6, 2048, %s60, [#allocation7], 128, 128, 8
    $region29: #{tpu_custom_call.1} parent=1 // pred_fallthru
      _
    // Predicated region
    $region30: #{tpu_custom_call.1} parent=1 // pred_check
      _
    $region31: #{tpu_custom_call.1} parent=1 // pred_check_branch
      %67 = sbr.rel (0) target = $region33
    $region32: #{tpu_custom_call.1} parent=1 // pred_region
      _
    $region33: #{tpu_custom_call.1} parent=1 // pred_fallthru
      _
    // Predicated region
    $region34: #{tpu_custom_call.1} parent=1 // pred_check
      _
    $region35: #{tpu_custom_call.1} parent=1 // pred_check_branch
      %69 = sbr.rel (0) target = $region37
    $region36: #{tpu_custom_call.1} parent=1 // pred_region
      %s71 = ssub.s32 2048, 2048
      %72 = vsyncadd [#allocation10], %s71
      %s73 = sshll.u32 [#allocation9], 4
      %s74 = int_to_ptr.vmem [resolvable:$true] %s73
      %79 = dma.hbm_to_vmem [thread:$0]  %s8, 2048, %s74, [#allocation10], 128, 128, 8
    $region37: #{tpu_custom_call.1} parent=1 // pred_fallthru
      _
    // Predicated region
    $region38: #{tpu_custom_call.1} parent=1 // pred_check
      _
    $region39: #{tpu_custom_call.1} parent=1 // pred_check_branch
      %81 = sbr.rel (0) target = $region41
    $region40: #{tpu_custom_call.1} parent=1 // pred_region
      _
    $region41: #{tpu_custom_call.1} parent=1 // pred_fallthru
      _
    // Predicated region
    $region42: #{tpu_custom_call.1} parent=1 // pred_check
      _
    $region43: #{tpu_custom_call.1} parent=1 // pred_check_branch
      %83 = sbr.rel (0) target = $region45
    $region44: #{tpu_custom_call.1} parent=1 // pred_region
      %84 = dma.done [#allocation4], 2048
    $region45: #{tpu_custom_call.1} parent=1 // pred_fallthru
      _
    // Predicated region
    $region46: #{tpu_custom_call.1} parent=1 // pred_check
      _
    $region47: #{tpu_custom_call.1} parent=1 // pred_check_branch
      %86 = sbr.rel (0) target = $region49
    $region48: #{tpu_custom_call.1} parent=1 // pred_region
      %87 = dma.done [#allocation7], 2048
    $region49: #{tpu_custom_call.1} parent=1 // pred_fallthru
      _
    // Predicated region
    $region50: #{tpu_custom_call.1} parent=1 // pred_check
      _
    $region51: #{tpu_custom_call.1} parent=1 // pred_check_branch
      %89 = sbr.rel (0) target = $region53
    $region52: #{tpu_custom_call.1} parent=1 // pred_region
      %90 = dma.done [#allocation7], 2048
    $region53: #{tpu_custom_call.1} parent=1 // pred_fallthru
      _
    // Predicated region
    $region54: #{tpu_custom_call.1} parent=1 // pred_check
      _
    $region55: #{tpu_custom_call.1} parent=1 // pred_check_branch
      %92 = sbr.rel (0) target = $region57
    $region56: #{tpu_custom_call.1} parent=1 // pred_region
      %93 = dma.done [#allocation10], 2048
    $region57: #{tpu_custom_call.1} parent=1 // pred_fallthru
      _
    %v94 = vld [vmem:[%s0] sm:$0xff]
    %v95 = vld [vmem:[%s0 + $0x8] sm:$0xff]
    %v96 = vld [vmem:[%s0 + $0x10] sm:$0xff]
    %v97 = vld [vmem:[%s0 + $0x18] sm:$0xff]
    %v98 = vld [vmem:[%s0 + $0x20] sm:$0xff]
    %v99 = vld [vmem:[%s0 + $0x28] sm:$0xff]
    %v100 = vld [vmem:[%s0 + $0x30] sm:$0xff]
    %v101 = vld [vmem:[%s0 + $0x38] sm:$0xff]
    %v102 = vld [vmem:[%s2] sm:$0xff]
    %v103 = vld [vmem:[%s2 + $0x8] sm:$0xff]
    %v104 = vld [vmem:[%s2 + $0x10] sm:$0xff]
    %v105 = vld [vmem:[%s2 + $0x18] sm:$0xff]
    %v106 = vld [vmem:[%s4] sm:$0x1]
    %v108 = vlaneseq
    %v109 = vshrl.u32 %v108, 7
    %v110 = vsub.s32 0, %v109
    %v111 = vrot.slane %v106, %v110
    %vm113 = vcmask 261120
    %v115 = vsel %vm113, %v94, 0
    %v118 = vsel %vm113, %v95, 0
    %v121 = vsel %vm113, %v96, 0
    %v124 = vsel %vm113, %v97, 0
    %v127 = vsel %vm113, %v98, 0
    %v130 = vsel %vm113, %v99, 0
    %v133 = vsel %vm113, %v100, 0
    %v136 = vsel %vm113, %v101, 0
    %138 = vmatprep.subr.mxu0 0.0
    %139 = vmatpush1.msra.mxu0 %v102
    %140 = vmatprep.subr.mxu0 0.0
    %141 = vmatpush1.msra.mxu0 %v103
    %142 = vmatprep.subr.mxu0 0.0
    %143 = vmatpush1.msra.mxu0 %v104
    %144 = vmatprep.subr.mxu0 0.0
    %145 = vmatpush1.msra.mxu0 %v105
    %146 = vmatprep.subr.mxu0 0.0
    %147 = vmatpush1.msra.mxu0 0.0
    %148 = vmatprep.subr.mxu0 0.0
    %149 = vmatpush1.msra.mxu0 0.0
    %150 = vmatprep.subr.mxu0 0.0
    %151 = vmatpush1.msra.mxu0 0.0
    %152 = vmatprep.subr.mxu0 0.0
    %153 = vmatpush1.msra.mxu0 0.0
    %154 = vmatprep.subr.mxu0 0.0
    %155 = vmatpush1.msra.mxu0 0.0
    %156 = vmatprep.subr.mxu0 0.0
    %157 = vmatpush1.msra.mxu0 0.0
    %158 = vmatprep.subr.mxu0 0.0
    %159 = vmatpush1.msra.mxu0 0.0
    %160 = vmatprep.subr.mxu0 0.0
    %161 = vmatpush1.msra.mxu0 0.0
    %162 = vmatprep.subr.mxu0 0.0
    %163 = vmatpush1.msra.mxu0 0.0
    %164 = vmatprep.subr.mxu0 0.0
    %165 = vmatpush1.msra.mxu0 0.0
    %166 = vmatprep.subr.mxu0 0.0
    %167 = vmatpush1.msra.mxu0 0.0
    %168 = vmatprep.subr.mxu0 0.0
    %169 = vmatpush1.msra.mxu0 0.0
    %170 = vmatprep.subr.mxu0 0.0
    %171 = vmatpush1.msra.mxu0 0.0
    %172 = vmatprep.subr.mxu0 0.0
    %173 = vmatpush1.msra.mxu0 0.0
    %174 = vmatprep.subr.mxu0 0.0
    %175 = vmatpush1.msra.mxu0 0.0
    %176 = vmatprep.subr.mxu0 0.0
    %177 = vmatpush1.msra.mxu0 0.0
    %178 = vmatprep.subr.mxu0 0.0
    %179 = vmatpush1.msra.mxu0 0.0
    %180 = vmatprep.subr.mxu0 0.0
    %181 = vmatpush1.msra.mxu0 0.0
    %182 = vmatprep.subr.mxu0 0.0
    %183 = vmatpush1.msra.mxu0 0.0
    %184 = vmatprep.subr.mxu0 0.0
    %185 = vmatpush1.msra.mxu0 0.0
    %186 = vmatprep.subr.mxu0 0.0
    %187 = vmatpush1.msra.mxu0 0.0
    %188 = vmatprep.subr.mxu0 0.0
    %189 = vmatpush1.msra.mxu0 0.0
    %190 = vmatprep.subr.mxu0 0.0
    %191 = vmatpush1.msra.mxu0 0.0
    %192 = vmatprep.subr.mxu0 0.0
    %193 = vmatpush1.msra.mxu0 0.0
    %194 = vmatprep.subr.mxu0 0.0
    %195 = vmatpush1.msra.mxu0 0.0
    %196 = vmatprep.subr.mxu0 0.0
    %197 = vmatpush1.msra.mxu0 0.0
    %198 = vmatprep.subr.mxu0 0.0
    %199 = vmatpush1.msra.mxu0 0.0
    %200 = vmatprep.subr.mxu0 0.0
    %201 = vmatpush1.msra.mxu0 0.0
    %202 = vmatprep.mubr.f32.mxu0 0.0
    %203 = vmatmul.mubr.f32.gmra.mrb[0].mxu0 %v115
    %v204 = vpop.f32.mrb[0].mxu0
    %v205 = vadd.f32 %v111, %v204
    %v206 = vpop.f32.mrb[0].mxu0
    %207 = vmatprep.mubr.f32.mxu0 0.0
    %208 = vmatmul.mubr.f32.gmra.mrb[0].mxu0 %v118
    %v209 = vpop.f32.mrb[0].mxu0
    %v210 = vadd.f32 %v111, %v209
    %v211 = vpop.f32.mrb[0].mxu0
    %212 = vmatprep.mubr.f32.mxu0 0.0
    %213 = vmatmul.mubr.f32.gmra.mrb[0].mxu0 %v121
    %v214 = vpop.f32.mrb[0].mxu0
    %v215 = vadd.f32 %v111, %v214
    %v216 = vpop.f32.mrb[0].mxu0
    %217 = vmatprep.mubr.f32.mxu0 0.0
    %218 = vmatmul.mubr.f32.gmra.mrb[0].mxu0 %v124
    %v219 = vpop.f32.mrb[0].mxu0
    %v220 = vadd.f32 %v111, %v219
    %v221 = vpop.f32.mrb[0].mxu0
    %222 = vmatprep.mubr.f32.mxu0 0.0
    %223 = vmatmul.mubr.f32.gmra.mrb[0].mxu0 %v127
    %v224 = vpop.f32.mrb[0].mxu0
    %v225 = vadd.f32 %v111, %v224
    %v226 = vpop.f32.mrb[0].mxu0
    %227 = vmatprep.mubr.f32.mxu0 0.0
    %228 = vmatmul.mubr.f32.gmra.mrb[0].mxu0 %v130
    %v229 = vpop.f32.mrb[0].mxu0
    %v230 = vadd.f32 %v111, %v229
    %v231 = vpop.f32.mrb[0].mxu0
    %232 = vmatprep.mubr.f32.mxu0 0.0
    %233 = vmatmul.mubr.f32.gmra.mrb[0].mxu0 %v133
    %v234 = vpop.f32.mrb[0].mxu0
    %v235 = vadd.f32 %v111, %v234
    %v236 = vpop.f32.mrb[0].mxu0
    %237 = vmatprep.mubr.f32.mxu0 0.0
    %238 = vmatmul.mubr.f32.gmra.mrb[0].mxu0 %v136
    %v239 = vpop.f32.mrb[0].mxu0
    %v240 = vadd.f32 %v111, %v239
    %v241 = vpop.f32.mrb[0].mxu0
    %242 = vdwg.mxu0
    %243 = vst [vmem:[#allocation2] sm:$0xff] %v205
    %244 = vst [vmem:[#allocation2 + $0x8] sm:$0xff] %v210
    %245 = vst [vmem:[#allocation2 + $0x10] sm:$0xff] %v215
    %246 = vst [vmem:[#allocation2 + $0x18] sm:$0xff] %v220
    %247 = vst [vmem:[#allocation2 + $0x20] sm:$0xff] %v225
    %248 = vst [vmem:[#allocation2 + $0x28] sm:$0xff] %v230
    %249 = vst [vmem:[#allocation2 + $0x30] sm:$0xff] %v235
    %250 = vst [vmem:[#allocation2 + $0x38] sm:$0xff] %v240
    %v251 = vld [vmem:[#allocation3] sm:$0xff]
    %v252 = vld [vmem:[#allocation3 + $0x8] sm:$0xff]
    %v253 = vld [vmem:[#allocation3 + $0x10] sm:$0xff]
    %v254 = vld [vmem:[#allocation3 + $0x18] sm:$0xff]
    %v255 = vld [vmem:[#allocation3 + $0x20] sm:$0xff]
    %v256 = vld [vmem:[#allocation3 + $0x28] sm:$0xff]
    %v257 = vld [vmem:[#allocation3 + $0x30] sm:$0xff]
    %v258 = vld [vmem:[#allocation3 + $0x38] sm:$0xff]
    %v259 = vld [vmem:[#allocation3 + $0x40] sm:$0xff]
    %v260 = vld [vmem:[#allocation3 + $0x48] sm:$0xff]
    %v261 = vld [vmem:[#allocation3 + $0x50] sm:$0xff]
    %v262 = vld [vmem:[#allocation3 + $0x58] sm:$0xff]
    %v263 = vld [vmem:[#allocation3 + $0x60] sm:$0xff]
    %v264 = vld [vmem:[#allocation3 + $0x68] sm:$0xff]
    %v265 = vld [vmem:[#allocation3 + $0x70] sm:$0xff]
    %v266 = vld [vmem:[#allocation3 + $0x78] sm:$0xff]
    %v267 = vld [vmem:[%s1] sm:$0xff]
    %v268 = vld [vmem:[#allocation2] sm:$0xff]
    %269 = vmatprep.subr.mxu0 0.0
    %270 = vmatpush1.msra.mxu0 %v251
    %271 = vmatprep.subr.mxu0 0.0
    %272 = vmatpush1.msra.mxu0 %v252
    %273 = vmatprep.subr.mxu0 0.0
    %274 = vmatpush1.msra.mxu0 %v253
    %275 = vmatprep.subr.mxu0 0.0
    %276 = vmatpush1.msra.mxu0 %v254
    %277 = vmatprep.subr.mxu0 0.0
    %278 = vmatpush1.msra.mxu0 %v255
    %279 = vmatprep.subr.mxu0 0.0
    %280 = vmatpush1.msra.mxu0 %v256
    %281 = vmatprep.subr.mxu0 0.0
    %282 = vmatpush1.msra.mxu0 %v257
    %283 = vmatprep.subr.mxu0 0.0
    %284 = vmatpush1.msra.mxu0 %v258
    %285 = vmatprep.subr.mxu0 0.0
    %286 = vmatpush1.msra.mxu0 %v259
    %287 = vmatprep.subr.mxu0 0.0
    %288 = vmatpush1.msra.mxu0 %v260
    %289 = vmatprep.subr.mxu0 0.0
    %290 = vmatpush1.msra.mxu0 %v261
    %291 = vmatprep.subr.mxu0 0.0
    %292 = vmatpush1.msra.mxu0 %v262
    %293 = vmatprep.subr.mxu0 0.0
    %294 = vmatpush1.msra.mxu0 %v263
    %295 = vmatprep.subr.mxu0 0.0
    %296 = vmatpush1.msra.mxu0 %v264
    %297 = vmatprep.subr.mxu0 0.0
    %298 = vmatpush1.msra.mxu0 %v265
    %299 = vmatprep.subr.mxu0 0.0
    %300 = vmatpush1.msra.mxu0 %v266
    %301 = vmatprep.subr.mxu0 0.0
    %302 = vmatpush1.msra.mxu0 0.0
    %303 = vmatprep.subr.mxu0 0.0
    %304 = vmatpush1.msra.mxu0 0.0
    %305 = vmatprep.subr.mxu0 0.0
    %306 = vmatpush1.msra.mxu0 0.0
    %307 = vmatprep.subr.mxu0 0.0
    %308 = vmatpush1.msra.mxu0 0.0
    %309 = vmatprep.subr.mxu0 0.0
    %310 = vmatpush1.msra.mxu0 0.0
    %311 = vmatprep.subr.mxu0 0.0
    %312 = vmatpush1.msra.mxu0 0.0
    %313 = vmatprep.subr.mxu0 0.0
    %314 = vmatpush1.msra.mxu0 0.0
    %315 = vmatprep.subr.mxu0 0.0
    %316 = vmatpush1.msra.mxu0 0.0
    %317 = vmatprep.subr.mxu0 0.0
    %318 = vmatpush1.msra.mxu0 0.0
    %319 = vmatprep.subr.mxu0 0.0
    %320 = vmatpush1.msra.mxu0 0.0
    %321 = vmatprep.subr.mxu0 0.0
    %322 = vmatpush1.msra.mxu0 0.0
    %323 = vmatprep.subr.mxu0 0.0
    %324 = vmatpush1.msra.mxu0 0.0
    %325 = vmatprep.subr.mxu0 0.0
    %326 = vmatpush1.msra.mxu0 0.0
    %327 = vmatprep.subr.mxu0 0.0
    %328 = vmatpush1.msra.mxu0 0.0
    %329 = vmatprep.subr.mxu0 0.0
    %330 = vmatpush1.msra.mxu0 0.0
    %331 = vmatprep.subr.mxu0 0.0
    %332 = vmatpush1.msra.mxu0 0.0
    %333 = vmatprep.mubr.f32.mxu0 0.0
    %334 = vmatmul.mubr.f32.gmra.mrb[0].mxu0 %v267
    %v335 = vpop.f32.mrb[0].mxu0
    %v336 = vadd.f32 0.0, %v335
    %v337 = vpop.f32.mrb[0].mxu0
    %338 = vdwg.mxu0
    %v339 = vadd.f32 %v268, %v336
    %v340 = vmax.f32 %v339, 0.0
    %341 = vst [vmem:[#allocation2] sm:$0xff] %v340
    %s342 = scalar_lea.vmem [#allocation2], 8
    %v343 = vld [vmem:[%s342] sm:$0xff]
    %344 = vmatprep.subr.mxu0 0.0
    %345 = vmatpush1.msra.mxu0 %v251
    %346 = vmatprep.subr.mxu0 0.0
    %347 = vmatpush1.msra.mxu0 %v252
    %348 = vmatprep.subr.mxu0 0.0
    %349 = vmatpush1.msra.mxu0 %v253
    %350 = vmatprep.subr.mxu0 0.0
    %351 = vmatpush1.msra.mxu0 %v254
    %352 = vmatprep.subr.mxu0 0.0
    %353 = vmatpush1.msra.mxu0 %v255
    %354 = vmatprep.subr.mxu0 0.0
    %355 = vmatpush1.msra.mxu0 %v256
    %356 = vmatprep.subr.mxu0 0.0
    %357 = vmatpush1.msra.mxu0 %v257
    %358 = vmatprep.subr.mxu0 0.0
    %359 = vmatpush1.msra.mxu0 %v258
    %360 = vmatprep.subr.mxu0 0.0
    %361 = vmatpush1.msra.mxu0 %v259
    %362 = vmatprep.subr.mxu0 0.0
    %363 = vmatpush1.msra.mxu0 %v260
    %364 = vmatprep.subr.mxu0 0.0
    %365 = vmatpush1.msra.mxu0 %v261
    %366 = vmatprep.subr.mxu0 0.0
    %367 = vmatpush1.msra.mxu0 %v262
    %368 = vmatprep.subr.mxu0 0.0
    %369 = vmatpush1.msra.mxu0 %v263
    %370 = vmatprep.subr.mxu0 0.0
    %371 = vmatpush1.msra.mxu0 %v264
    %372 = vmatprep.subr.mxu0 0.0
    %373 = vmatpush1.msra.mxu0 %v265
    %374 = vmatprep.subr.mxu0 0.0
    %375 = vmatpush1.msra.mxu0 %v266
    %376 = vmatprep.subr.mxu0 0.0
    %377 = vmatpush1.msra.mxu0 0.0
    %378 = vmatprep.subr.mxu0 0.0
    %379 = vmatpush1.msra.mxu0 0.0
    %380 = vmatprep.subr.mxu0 0.0
    %381 = vmatpush1.msra.mxu0 0.0
    %382 = vmatprep.subr.mxu0 0.0
    %383 = vmatpush1.msra.mxu0 0.0
    %384 = vmatprep.subr.mxu0 0.0
    %385 = vmatpush1.msra.mxu0 0.0
    %386 = vmatprep.subr.mxu0 0.0
    %387 = vmatpush1.msra.mxu0 0.0
    %388 = vmatprep.subr.mxu0 0.0
    %389 = vmatpush1.msra.mxu0 0.0
    %390 = vmatprep.subr.mxu0 0.0
    %391 = vmatpush1.msra.mxu0 0.0
    %392 = vmatprep.subr.mxu0 0.0
    %393 = vmatpush1.msra.mxu0 0.0
    %394 = vmatprep.subr.mxu0 0.0
    %395 = vmatpush1.msra.mxu0 0.0
    %396 = vmatprep.subr.mxu0 0.0
    %397 = vmatpush1.msra.mxu0 0.0
    %398 = vmatprep.subr.mxu0 0.0
    %399 = vmatpush1.msra.mxu0 0.0
    %400 = vmatprep.subr.mxu0 0.0
    %401 = vmatpush1.msra.mxu0 0.0
    %402 = vmatprep.subr.mxu0 0.0
    %403 = vmatpush1.msra.mxu0 0.0
    %404 = vmatprep.subr.mxu0 0.0
    %405 = vmatpush1.msra.mxu0 0.0
    %406 = vmatprep.subr.mxu0 0.0
    %407 = vmatpush1.msra.mxu0 0.0
    %408 = vmatprep.mubr.f32.mxu0 0.0
    %409 = vmatmul.mubr.f32.gmra.mrb[0].mxu0 %v340
    %v410 = vpop.f32.mrb[0].mxu0
    %v411 = vadd.f32 0.0, %v410
    %v412 = vpop.f32.mrb[0].mxu0
    %413 = vdwg.mxu0
    %v414 = vadd.f32 %v343, %v411
    %v415 = vmax.f32 %v414, 0.0
    %416 = vst [vmem:[%s342] sm:$0xff] %v415
    %s417 = scalar_lea.vmem [#allocation2], 16
    %v418 = vld [vmem:[%s417] sm:$0xff]
    %419 = vmatprep.subr.mxu0 0.0
    %420 = vmatpush1.msra.mxu0 %v251
    %421 = vmatprep.subr.mxu0 0.0
    %422 = vmatpush1.msra.mxu0 %v252
    %423 = vmatprep.subr.mxu0 0.0
    %424 = vmatpush1.msra.mxu0 %v253
    %425 = vmatprep.subr.mxu0 0.0
    %426 = vmatpush1.msra.mxu0 %v254
    %427 = vmatprep.subr.mxu0 0.0
    %428 = vmatpush1.msra.mxu0 %v255
    %429 = vmatprep.subr.mxu0 0.0
    %430 = vmatpush1.msra.mxu0 %v256
    %431 = vmatprep.subr.mxu0 0.0
    %432 = vmatpush1.msra.mxu0 %v257
    %433 = vmatprep.subr.mxu0 0.0
    %434 = vmatpush1.msra.mxu0 %v258
    %435 = vmatprep.subr.mxu0 0.0
    %436 = vmatpush1.msra.mxu0 %v259
    %437 = vmatprep.subr.mxu0 0.0
    %438 = vmatpush1.msra.mxu0 %v260
    %439 = vmatprep.subr.mxu0 0.0
    %440 = vmatpush1.msra.mxu0 %v261
    %441 = vmatprep.subr.mxu0 0.0
    %442 = vmatpush1.msra.mxu0 %v262
    %443 = vmatprep.subr.mxu0 0.0
    %444 = vmatpush1.msra.mxu0 %v263
    %445 = vmatprep.subr.mxu0 0.0
    %446 = vmatpush1.msra.mxu0 %v264
    %447 = vmatprep.subr.mxu0 0.0
    %448 = vmatpush1.msra.mxu0 %v265
    %449 = vmatprep.subr.mxu0 0.0
    %450 = vmatpush1.msra.mxu0 %v266
    %451 = vmatprep.subr.mxu0 0.0
    %452 = vmatpush1.msra.mxu0 0.0
    %453 = vmatprep.subr.mxu0 0.0
    %454 = vmatpush1.msra.mxu0 0.0
    %455 = vmatprep.subr.mxu0 0.0
    %456 = vmatpush1.msra.mxu0 0.0
    %457 = vmatprep.subr.mxu0 0.0
    %458 = vmatpush1.msra.mxu0 0.0
    %459 = vmatprep.subr.mxu0 0.0
    %460 = vmatpush1.msra.mxu0 0.0
    %461 = vmatprep.subr.mxu0 0.0
    %462 = vmatpush1.msra.mxu0 0.0
    %463 = vmatprep.subr.mxu0 0.0
    %464 = vmatpush1.msra.mxu0 0.0
    %465 = vmatprep.subr.mxu0 0.0
    %466 = vmatpush1.msra.mxu0 0.0
    %467 = vmatprep.subr.mxu0 0.0
    %468 = vmatpush1.msra.mxu0 0.0
    %469 = vmatprep.subr.mxu0 0.0
    %470 = vmatpush1.msra.mxu0 0.0
    %471 = vmatprep.subr.mxu0 0.0
    %472 = vmatpush1.msra.mxu0 0.0
    %473 = vmatprep.subr.mxu0 0.0
    %474 = vmatpush1.msra.mxu0 0.0
    %475 = vmatprep.subr.mxu0 0.0
    %476 = vmatpush1.msra.mxu0 0.0
    %477 = vmatprep.subr.mxu0 0.0
    %478 = vmatpush1.msra.mxu0 0.0
    %479 = vmatprep.subr.mxu0 0.0
    %480 = vmatpush1.msra.mxu0 0.0
    %481 = vmatprep.subr.mxu0 0.0
    %482 = vmatpush1.msra.mxu0 0.0
    %483 = vmatprep.mubr.f32.mxu0 0.0
    %484 = vmatmul.mubr.f32.gmra.mrb[0].mxu0 %v415
    %v485 = vpop.f32.mrb[0].mxu0
    %v486 = vadd.f32 0.0, %v485
    %v487 = vpop.f32.mrb[0].mxu0
    %488 = vdwg.mxu0
    %v489 = vadd.f32 %v418, %v486
    %v490 = vmax.f32 %v489, 0.0
    %491 = vst [vmem:[%s417] sm:$0xff] %v490
    %s492 = scalar_lea.vmem [#allocation2], 24
    %v493 = vld [vmem:[%s492] sm:$0xff]
    %494 = vmatprep.subr.mxu0 0.0
    %495 = vmatpush1.msra.mxu0 %v251
    %496 = vmatprep.subr.mxu0 0.0
    %497 = vmatpush1.msra.mxu0 %v252
    %498 = vmatprep.subr.mxu0 0.0
    %499 = vmatpush1.msra.mxu0 %v253
    %500 = vmatprep.subr.mxu0 0.0
    %501 = vmatpush1.msra.mxu0 %v254
    %502 = vmatprep.subr.mxu0 0.0
    %503 = vmatpush1.msra.mxu0 %v255
    %504 = vmatprep.subr.mxu0 0.0
    %505 = vmatpush1.msra.mxu0 %v256
    %506 = vmatprep.subr.mxu0 0.0
    %507 = vmatpush1.msra.mxu0 %v257
    %508 = vmatprep.subr.mxu0 0.0
    %509 = vmatpush1.msra.mxu0 %v258
    %510 = vmatprep.subr.mxu0 0.0
    %511 = vmatpush1.msra.mxu0 %v259
    %512 = vmatprep.subr.mxu0 0.0
    %513 = vmatpush1.msra.mxu0 %v260
    %514 = vmatprep.subr.mxu0 0.0
    %515 = vmatpush1.msra.mxu0 %v261
    %516 = vmatprep.subr.mxu0 0.0
    %517 = vmatpush1.msra.mxu0 %v262
    %518 = vmatprep.subr.mxu0 0.0
    %519 = vmatpush1.msra.mxu0 %v263
    %520 = vmatprep.subr.mxu0 0.0
    %521 = vmatpush1.msra.mxu0 %v264
    %522 = vmatprep.subr.mxu0 0.0
    %523 = vmatpush1.msra.mxu0 %v265
    %524 = vmatprep.subr.mxu0 0.0
    %525 = vmatpush1.msra.mxu0 %v266
    %526 = vmatprep.subr.mxu0 0.0
    %527 = vmatpush1.msra.mxu0 0.0
    %528 = vmatprep.subr.mxu0 0.0
    %529 = vmatpush1.msra.mxu0 0.0
    %530 = vmatprep.subr.mxu0 0.0
    %531 = vmatpush1.msra.mxu0 0.0
    %532 = vmatprep.subr.mxu0 0.0
    %533 = vmatpush1.msra.mxu0 0.0
    %534 = vmatprep.subr.mxu0 0.0
    %535 = vmatpush1.msra.mxu0 0.0
    %536 = vmatprep.subr.mxu0 0.0
    %537 = vmatpush1.msra.mxu0 0.0
    %538 = vmatprep.subr.mxu0 0.0
    %539 = vmatpush1.msra.mxu0 0.0
    %540 = vmatprep.subr.mxu0 0.0
    %541 = vmatpush1.msra.mxu0 0.0
    %542 = vmatprep.subr.mxu0 0.0
    %543 = vmatpush1.msra.mxu0 0.0
    %544 = vmatprep.subr.mxu0 0.0
    %545 = vmatpush1.msra.mxu0 0.0
    %546 = vmatprep.subr.mxu0 0.0
    %547 = vmatpush1.msra.mxu0 0.0
    %548 = vmatprep.subr.mxu0 0.0
    %549 = vmatpush1.msra.mxu0 0.0
    %550 = vmatprep.subr.mxu0 0.0
    %551 = vmatpush1.msra.mxu0 0.0
    %552 = vmatprep.subr.mxu0 0.0
    %553 = vmatpush1.msra.mxu0 0.0
    %554 = vmatprep.subr.mxu0 0.0
    %555 = vmatpush1.msra.mxu0 0.0
    %556 = vmatprep.subr.mxu0 0.0
    %557 = vmatpush1.msra.mxu0 0.0
    %558 = vmatprep.mubr.f32.mxu0 0.0
    %559 = vmatmul.mubr.f32.gmra.mrb[0].mxu0 %v490
    %v560 = vpop.f32.mrb[0].mxu0
    %v561 = vadd.f32 0.0, %v560
    %v562 = vpop.f32.mrb[0].mxu0
    %563 = vdwg.mxu0
    %v564 = vadd.f32 %v493, %v561
    %v565 = vmax.f32 %v564, 0.0
    %566 = vst [vmem:[%s492] sm:$0xff] %v565
    %s567 = scalar_lea.vmem [#allocation2], 32
    %v568 = vld [vmem:[%s567] sm:$0xff]
    %569 = vmatprep.subr.mxu0 0.0
    %570 = vmatpush1.msra.mxu0 %v251
    %571 = vmatprep.subr.mxu0 0.0
    %572 = vmatpush1.msra.mxu0 %v252
    %573 = vmatprep.subr.mxu0 0.0
    %574 = vmatpush1.msra.mxu0 %v253
    %575 = vmatprep.subr.mxu0 0.0
    %576 = vmatpush1.msra.mxu0 %v254
    %577 = vmatprep.subr.mxu0 0.0
    %578 = vmatpush1.msra.mxu0 %v255
    %579 = vmatprep.subr.mxu0 0.0
    %580 = vmatpush1.msra.mxu0 %v256
    %581 = vmatprep.subr.mxu0 0.0
    %582 = vmatpush1.msra.mxu0 %v257
    %583 = vmatprep.subr.mxu0 0.0
    %584 = vmatpush1.msra.mxu0 %v258
    %585 = vmatprep.subr.mxu0 0.0
    %586 = vmatpush1.msra.mxu0 %v259
    %587 = vmatprep.subr.mxu0 0.0
    %588 = vmatpush1.msra.mxu0 %v260
    %589 = vmatprep.subr.mxu0 0.0
    %590 = vmatpush1.msra.mxu0 %v261
    %591 = vmatprep.subr.mxu0 0.0
    %592 = vmatpush1.msra.mxu0 %v262
    %593 = vmatprep.subr.mxu0 0.0
    %594 = vmatpush1.msra.mxu0 %v263
    %595 = vmatprep.subr.mxu0 0.0
    %596 = vmatpush1.msra.mxu0 %v264
    %597 = vmatprep.subr.mxu0 0.0
    %598 = vmatpush1.msra.mxu0 %v265
    %599 = vmatprep.subr.mxu0 0.0
    %600 = vmatpush1.msra.mxu0 %v266
    %601 = vmatprep.subr.mxu0 0.0
    %602 = vmatpush1.msra.mxu0 0.0
    %603 = vmatprep.subr.mxu0 0.0
    %604 = vmatpush1.msra.mxu0 0.0
    %605 = vmatprep.subr.mxu0 0.0
    %606 = vmatpush1.msra.mxu0 0.0
    %607 = vmatprep.subr.mxu0 0.0
    %608 = vmatpush1.msra.mxu0 0.0
    %609 = vmatprep.subr.mxu0 0.0
    %610 = vmatpush1.msra.mxu0 0.0
    %611 = vmatprep.subr.mxu0 0.0
    %612 = vmatpush1.msra.mxu0 0.0
    %613 = vmatprep.subr.mxu0 0.0
    %614 = vmatpush1.msra.mxu0 0.0
    %615 = vmatprep.subr.mxu0 0.0
    %616 = vmatpush1.msra.mxu0 0.0
    %617 = vmatprep.subr.mxu0 0.0
    %618 = vmatpush1.msra.mxu0 0.0
    %619 = vmatprep.subr.mxu0 0.0
    %620 = vmatpush1.msra.mxu0 0.0
    %621 = vmatprep.subr.mxu0 0.0
    %622 = vmatpush1.msra.mxu0 0.0
    %623 = vmatprep.subr.mxu0 0.0
    %624 = vmatpush1.msra.mxu0 0.0
    %625 = vmatprep.subr.mxu0 0.0
    %626 = vmatpush1.msra.mxu0 0.0
    %627 = vmatprep.subr.mxu0 0.0
    %628 = vmatpush1.msra.mxu0 0.0
    %629 = vmatprep.subr.mxu0 0.0
    %630 = vmatpush1.msra.mxu0 0.0
    %631 = vmatprep.subr.mxu0 0.0
    %632 = vmatpush1.msra.mxu0 0.0
    %633 = vmatprep.mubr.f32.mxu0 0.0
    %634 = vmatmul.mubr.f32.gmra.mrb[0].mxu0 %v565
    %v635 = vpop.f32.mrb[0].mxu0
    %v636 = vadd.f32 0.0, %v635
    %v637 = vpop.f32.mrb[0].mxu0
    %638 = vdwg.mxu0
    %v639 = vadd.f32 %v568, %v636
    %v640 = vmax.f32 %v639, 0.0
    %641 = vst [vmem:[%s567] sm:$0xff] %v640
    %s642 = scalar_lea.vmem [#allocation2], 40
    %v643 = vld [vmem:[%s642] sm:$0xff]
    %644 = vmatprep.subr.mxu0 0.0
    %645 = vmatpush1.msra.mxu0 %v251
    %646 = vmatprep.subr.mxu0 0.0
    %647 = vmatpush1.msra.mxu0 %v252
    %648 = vmatprep.subr.mxu0 0.0
    %649 = vmatpush1.msra.mxu0 %v253
    %650 = vmatprep.subr.mxu0 0.0
    %651 = vmatpush1.msra.mxu0 %v254
    %652 = vmatprep.subr.mxu0 0.0
    %653 = vmatpush1.msra.mxu0 %v255
    %654 = vmatprep.subr.mxu0 0.0
    %655 = vmatpush1.msra.mxu0 %v256
    %656 = vmatprep.subr.mxu0 0.0
    %657 = vmatpush1.msra.mxu0 %v257
    %658 = vmatprep.subr.mxu0 0.0
    %659 = vmatpush1.msra.mxu0 %v258
    %660 = vmatprep.subr.mxu0 0.0
    %661 = vmatpush1.msra.mxu0 %v259
    %662 = vmatprep.subr.mxu0 0.0
    %663 = vmatpush1.msra.mxu0 %v260
    %664 = vmatprep.subr.mxu0 0.0
    %665 = vmatpush1.msra.mxu0 %v261
    %666 = vmatprep.subr.mxu0 0.0
    %667 = vmatpush1.msra.mxu0 %v262
    %668 = vmatprep.subr.mxu0 0.0
    %669 = vmatpush1.msra.mxu0 %v263
    %670 = vmatprep.subr.mxu0 0.0
    %671 = vmatpush1.msra.mxu0 %v264
    %672 = vmatprep.subr.mxu0 0.0
    %673 = vmatpush1.msra.mxu0 %v265
    %674 = vmatprep.subr.mxu0 0.0
    %675 = vmatpush1.msra.mxu0 %v266
    %676 = vmatprep.subr.mxu0 0.0
    %677 = vmatpush1.msra.mxu0 0.0
    %678 = vmatprep.subr.mxu0 0.0
    %679 = vmatpush1.msra.mxu0 0.0
    %680 = vmatprep.subr.mxu0 0.0
    %681 = vmatpush1.msra.mxu0 0.0
    %682 = vmatprep.subr.mxu0 0.0
    %683 = vmatpush1.msra.mxu0 0.0
    %684 = vmatprep.subr.mxu0 0.0
    %685 = vmatpush1.msra.mxu0 0.0
    %686 = vmatprep.subr.mxu0 0.0
    %687 = vmatpush1.msra.mxu0 0.0
    %688 = vmatprep.subr.mxu0 0.0
    %689 = vmatpush1.msra.mxu0 0.0
    %690 = vmatprep.subr.mxu0 0.0
    %691 = vmatpush1.msra.mxu0 0.0
    %692 = vmatprep.subr.mxu0 0.0
    %693 = vmatpush1.msra.mxu0 0.0
    %694 = vmatprep.subr.mxu0 0.0
    %695 = vmatpush1.msra.mxu0 0.0
    %696 = vmatprep.subr.mxu0 0.0
    %697 = vmatpush1.msra.mxu0 0.0
    %698 = vmatprep.subr.mxu0 0.0
    %699 = vmatpush1.msra.mxu0 0.0
    %700 = vmatprep.subr.mxu0 0.0
    %701 = vmatpush1.msra.mxu0 0.0
    %702 = vmatprep.subr.mxu0 0.0
    %703 = vmatpush1.msra.mxu0 0.0
    %704 = vmatprep.subr.mxu0 0.0
    %705 = vmatpush1.msra.mxu0 0.0
    %706 = vmatprep.subr.mxu0 0.0
    %707 = vmatpush1.msra.mxu0 0.0
    %708 = vmatprep.mubr.f32.mxu0 0.0
    %709 = vmatmul.mubr.f32.gmra.mrb[0].mxu0 %v640
    %v710 = vpop.f32.mrb[0].mxu0
    %v711 = vadd.f32 0.0, %v710
    %v712 = vpop.f32.mrb[0].mxu0
    %713 = vdwg.mxu0
    %v714 = vadd.f32 %v643, %v711
    %v715 = vmax.f32 %v714, 0.0
    %716 = vst [vmem:[%s642] sm:$0xff] %v715
    %s717 = scalar_lea.vmem [#allocation2], 48
    %v718 = vld [vmem:[%s717] sm:$0xff]
    %719 = vmatprep.subr.mxu0 0.0
    %720 = vmatpush1.msra.mxu0 %v251
    %721 = vmatprep.subr.mxu0 0.0
    %722 = vmatpush1.msra.mxu0 %v252
    %723 = vmatprep.subr.mxu0 0.0
    %724 = vmatpush1.msra.mxu0 %v253
    %725 = vmatprep.subr.mxu0 0.0
    %726 = vmatpush1.msra.mxu0 %v254
    %727 = vmatprep.subr.mxu0 0.0
    %728 = vmatpush1.msra.mxu0 %v255
    %729 = vmatprep.subr.mxu0 0.0
    %730 = vmatpush1.msra.mxu0 %v256
    %731 = vmatprep.subr.mxu0 0.0
    %732 = vmatpush1.msra.mxu0 %v257
    %733 = vmatprep.subr.mxu0 0.0
    %734 = vmatpush1.msra.mxu0 %v258
    %735 = vmatprep.subr.mxu0 0.0
    %736 = vmatpush1.msra.mxu0 %v259
    %737 = vmatprep.subr.mxu0 0.0
    %738 = vmatpush1.msra.mxu0 %v260
    %739 = vmatprep.subr.mxu0 0.0
    %740 = vmatpush1.msra.mxu0 %v261
    %741 = vmatprep.subr.mxu0 0.0
    %742 = vmatpush1.msra.mxu0 %v262
    %743 = vmatprep.subr.mxu0 0.0
    %744 = vmatpush1.msra.mxu0 %v263
    %745 = vmatprep.subr.mxu0 0.0
    %746 = vmatpush1.msra.mxu0 %v264
    %747 = vmatprep.subr.mxu0 0.0
    %748 = vmatpush1.msra.mxu0 %v265
    %749 = vmatprep.subr.mxu0 0.0
    %750 = vmatpush1.msra.mxu0 %v266
    %751 = vmatprep.subr.mxu0 0.0
    %752 = vmatpush1.msra.mxu0 0.0
    %753 = vmatprep.subr.mxu0 0.0
    %754 = vmatpush1.msra.mxu0 0.0
    %755 = vmatprep.subr.mxu0 0.0
    %756 = vmatpush1.msra.mxu0 0.0
    %757 = vmatprep.subr.mxu0 0.0
    %758 = vmatpush1.msra.mxu0 0.0
    %759 = vmatprep.subr.mxu0 0.0
    %760 = vmatpush1.msra.mxu0 0.0
    %761 = vmatprep.subr.mxu0 0.0
    %762 = vmatpush1.msra.mxu0 0.0
    %763 = vmatprep.subr.mxu0 0.0
    %764 = vmatpush1.msra.mxu0 0.0
    %765 = vmatprep.subr.mxu0 0.0
    %766 = vmatpush1.msra.mxu0 0.0
    %767 = vmatprep.subr.mxu0 0.0
    %768 = vmatpush1.msra.mxu0 0.0
    %769 = vmatprep.subr.mxu0 0.0
    %770 = vmatpush1.msra.mxu0 0.0
    %771 = vmatprep.subr.mxu0 0.0
    %772 = vmatpush1.msra.mxu0 0.0
    %773 = vmatprep.subr.mxu0 0.0
    %774 = vmatpush1.msra.mxu0 0.0
    %775 = vmatprep.subr.mxu0 0.0
    %776 = vmatpush1.msra.mxu0 0.0
    %777 = vmatprep.subr.mxu0 0.0
    %778 = vmatpush1.msra.mxu0 0.0
    %779 = vmatprep.subr.mxu0 0.0
    %780 = vmatpush1.msra.mxu0 0.0
    %781 = vmatprep.subr.mxu0 0.0
    %782 = vmatpush1.msra.mxu0 0.0
    %783 = vmatprep.mubr.f32.mxu0 0.0
    %784 = vmatmul.mubr.f32.gmra.mrb[0].mxu0 %v715
    %v785 = vpop.f32.mrb[0].mxu0
    %v786 = vadd.f32 0.0, %v785
    %v787 = vpop.f32.mrb[0].mxu0
    %788 = vdwg.mxu0
    %v789 = vadd.f32 %v718, %v786
    %v790 = vmax.f32 %v789, 0.0
    %791 = vst [vmem:[%s717] sm:$0xff] %v790
    %s792 = scalar_lea.vmem [#allocation2], 56
    %v793 = vld [vmem:[%s792] sm:$0xff]
    %794 = vmatprep.subr.mxu0 0.0
    %795 = vmatpush1.msra.mxu0 %v251
    %796 = vmatprep.subr.mxu0 0.0
    %797 = vmatpush1.msra.mxu0 %v252
    %798 = vmatprep.subr.mxu0 0.0
    %799 = vmatpush1.msra.mxu0 %v253
    %800 = vmatprep.subr.mxu0 0.0
    %801 = vmatpush1.msra.mxu0 %v254
    %802 = vmatprep.subr.mxu0 0.0
    %803 = vmatpush1.msra.mxu0 %v255
    %804 = vmatprep.subr.mxu0 0.0
    %805 = vmatpush1.msra.mxu0 %v256
    %806 = vmatprep.subr.mxu0 0.0
    %807 = vmatpush1.msra.mxu0 %v257
    %808 = vmatprep.subr.mxu0 0.0
    %809 = vmatpush1.msra.mxu0 %v258
    %810 = vmatprep.subr.mxu0 0.0
    %811 = vmatpush1.msra.mxu0 %v259
    %812 = vmatprep.subr.mxu0 0.0
    %813 = vmatpush1.msra.mxu0 %v260
    %814 = vmatprep.subr.mxu0 0.0
    %815 = vmatpush1.msra.mxu0 %v261
    %816 = vmatprep.subr.mxu0 0.0
    %817 = vmatpush1.msra.mxu0 %v262
    %818 = vmatprep.subr.mxu0 0.0
    %819 = vmatpush1.msra.mxu0 %v263
    %820 = vmatprep.subr.mxu0 0.0
    %821 = vmatpush1.msra.mxu0 %v264
    %822 = vmatprep.subr.mxu0 0.0
    %823 = vmatpush1.msra.mxu0 %v265
    %824 = vmatprep.subr.mxu0 0.0
    %825 = vmatpush1.msra.mxu0 %v266
    %826 = vmatprep.subr.mxu0 0.0
    %827 = vmatpush1.msra.mxu0 0.0
    %828 = vmatprep.subr.mxu0 0.0
    %829 = vmatpush1.msra.mxu0 0.0
    %830 = vmatprep.subr.mxu0 0.0
    %831 = vmatpush1.msra.mxu0 0.0
    %832 = vmatprep.subr.mxu0 0.0
    %833 = vmatpush1.msra.mxu0 0.0
    %834 = vmatprep.subr.mxu0 0.0
    %835 = vmatpush1.msra.mxu0 0.0
    %836 = vmatprep.subr.mxu0 0.0
    %837 = vmatpush1.msra.mxu0 0.0
    %838 = vmatprep.subr.mxu0 0.0
    %839 = vmatpush1.msra.mxu0 0.0
    %840 = vmatprep.subr.mxu0 0.0
    %841 = vmatpush1.msra.mxu0 0.0
    %842 = vmatprep.subr.mxu0 0.0
    %843 = vmatpush1.msra.mxu0 0.0
    %844 = vmatprep.subr.mxu0 0.0
    %845 = vmatpush1.msra.mxu0 0.0
    %846 = vmatprep.subr.mxu0 0.0
    %847 = vmatpush1.msra.mxu0 0.0
    %848 = vmatprep.subr.mxu0 0.0
    %849 = vmatpush1.msra.mxu0 0.0
    %850 = vmatprep.subr.mxu0 0.0
    %851 = vmatpush1.msra.mxu0 0.0
    %852 = vmatprep.subr.mxu0 0.0
    %853 = vmatpush1.msra.mxu0 0.0
    %854 = vmatprep.subr.mxu0 0.0
    %855 = vmatpush1.msra.mxu0 0.0
    %856 = vmatprep.subr.mxu0 0.0
    %857 = vmatpush1.msra.mxu0 0.0
    %858 = vmatprep.mubr.f32.mxu0 0.0
    %859 = vmatmul.mubr.f32.gmra.mrb[0].mxu0 %v790
    %v860 = vpop.f32.mrb[0].mxu0
    %v861 = vadd.f32 0.0, %v860
    %v862 = vpop.f32.mrb[0].mxu0
    %863 = vdwg.mxu0
    %v864 = vadd.f32 %v793, %v861
    %v865 = vmax.f32 %v864, 0.0
    %866 = vst [vmem:[%s792] sm:$0xff] %v865
    %867 = vst [vmem:[#allocation12] sm:$0xff] %v865
    %v868 = vld [vmem:[#allocation2] sm:$0xff]
    %v869 = vld [vmem:[#allocation2 + $0x8] sm:$0xff]
    %v870 = vld [vmem:[#allocation2 + $0x10] sm:$0xff]
    %v871 = vld [vmem:[#allocation2 + $0x18] sm:$0xff]
    %v872 = vld [vmem:[#allocation2 + $0x20] sm:$0xff]
    %v873 = vld [vmem:[#allocation2 + $0x28] sm:$0xff]
    %v874 = vld [vmem:[#allocation2 + $0x30] sm:$0xff]
    %v875 = vld [vmem:[#allocation2 + $0x38] sm:$0xff]
    %v876 = vld [vmem:[#allocation6] sm:$0xff]
    %v877 = vld [vmem:[#allocation6 + $0x8] sm:$0xff]
    %v878 = vld [vmem:[#allocation6 + $0x10] sm:$0xff]
    %v879 = vld [vmem:[#allocation6 + $0x18] sm:$0xff]
    %v880 = vld [vmem:[#allocation6 + $0x20] sm:$0xff]
    %v881 = vld [vmem:[#allocation6 + $0x28] sm:$0xff]
    %v882 = vld [vmem:[#allocation6 + $0x30] sm:$0xff]
    %v883 = vld [vmem:[#allocation6 + $0x38] sm:$0xff]
    %v884 = vld [vmem:[#allocation6 + $0x40] sm:$0xff]
    %v885 = vld [vmem:[#allocation6 + $0x48] sm:$0xff]
    %v886 = vld [vmem:[#allocation6 + $0x50] sm:$0xff]
    %v887 = vld [vmem:[#allocation6 + $0x58] sm:$0xff]
    %v888 = vld [vmem:[#allocation6 + $0x60] sm:$0xff]
    %v889 = vld [vmem:[#allocation6 + $0x68] sm:$0xff]
    %v890 = vld [vmem:[#allocation6 + $0x70] sm:$0xff]
    %v891 = vld [vmem:[#allocation6 + $0x78] sm:$0xff]
    %v892 = vld [vmem:[%s7] sm:$0x1]
    %v894 = vlaneseq
    %v895 = vshrl.u32 %v894, 7
    %v896 = vsub.s32 0, %v895
    %v897 = vrot.slane %v892, %v896
    %899 = vmatprep.subr.mxu0 0.0
    %900 = vmatpush1.msra.mxu0 %v876
    %901 = vmatprep.subr.mxu0 0.0
    %902 = vmatpush1.msra.mxu0 %v877
    %903 = vmatprep.subr.mxu0 0.0
    %904 = vmatpush1.msra.mxu0 %v878
    %905 = vmatprep.subr.mxu0 0.0
    %906 = vmatpush1.msra.mxu0 %v879
    %907 = vmatprep.subr.mxu0 0.0
    %908 = vmatpush1.msra.mxu0 %v880
    %909 = vmatprep.subr.mxu0 0.0
    %910 = vmatpush1.msra.mxu0 %v881
    %911 = vmatprep.subr.mxu0 0.0
    %912 = vmatpush1.msra.mxu0 %v882
    %913 = vmatprep.subr.mxu0 0.0
    %914 = vmatpush1.msra.mxu0 %v883
    %915 = vmatprep.subr.mxu0 0.0
    %916 = vmatpush1.msra.mxu0 %v884
    %917 = vmatprep.subr.mxu0 0.0
    %918 = vmatpush1.msra.mxu0 %v885
    %919 = vmatprep.subr.mxu0 0.0
    %920 = vmatpush1.msra.mxu0 %v886
    %921 = vmatprep.subr.mxu0 0.0
    %922 = vmatpush1.msra.mxu0 %v887
    %923 = vmatprep.subr.mxu0 0.0
    %924 = vmatpush1.msra.mxu0 %v888
    %925 = vmatprep.subr.mxu0 0.0
    %926 = vmatpush1.msra.mxu0 %v889
    %927 = vmatprep.subr.mxu0 0.0
    %928 = vmatpush1.msra.mxu0 %v890
    %929 = vmatprep.subr.mxu0 0.0
    %930 = vmatpush1.msra.mxu0 %v891
    %931 = vmatprep.subr.mxu0 0.0
    %932 = vmatpush1.msra.mxu0 0.0
    %933 = vmatprep.subr.mxu0 0.0
    %934 = vmatpush1.msra.mxu0 0.0
    %935 = vmatprep.subr.mxu0 0.0
    %936 = vmatpush1.msra.mxu0 0.0
    %937 = vmatprep.subr.mxu0 0.0
    %938 = vmatpush1.msra.mxu0 0.0
    %939 = vmatprep.subr.mxu0 0.0
    %940 = vmatpush1.msra.mxu0 0.0
    %941 = vmatprep.subr.mxu0 0.0
    %942 = vmatpush1.msra.mxu0 0.0
    %943 = vmatprep.subr.mxu0 0.0
    %944 = vmatpush1.msra.mxu0 0.0
    %945 = vmatprep.subr.mxu0 0.0
    %946 = vmatpush1.msra.mxu0 0.0
    %947 = vmatprep.subr.mxu0 0.0
    %948 = vmatpush1.msra.mxu0 0.0
    %949 = vmatprep.subr.mxu0 0.0
    %950 = vmatpush1.msra.mxu0 0.0
    %951 = vmatprep.subr.mxu0 0.0
    %952 = vmatpush1.msra.mxu0 0.0
    %953 = vmatprep.subr.mxu0 0.0
    %954 = vmatpush1.msra.mxu0 0.0
    %955 = vmatprep.subr.mxu0 0.0
    %956 = vmatpush1.msra.mxu0 0.0
    %957 = vmatprep.subr.mxu0 0.0
    %958 = vmatpush1.msra.mxu0 0.0
    %959 = vmatprep.subr.mxu0 0.0
    %960 = vmatpush1.msra.mxu0 0.0
    %961 = vmatprep.subr.mxu0 0.0
    %962 = vmatpush1.msra.mxu0 0.0
    %963 = vmatprep.mubr.f32.mxu0 0.0
    %964 = vmatmul.mubr.f32.gmra.mrb[0].mxu0 %v868
    %v965 = vpop.f32.mrb[0].mxu0
    %v966 = vadd.f32 %v897, %v965
    %v967 = vpop.f32.mrb[0].mxu0
    %968 = vmatprep.mubr.f32.mxu0 0.0
    %969 = vmatmul.mubr.f32.gmra.mrb[0].mxu0 %v869
    %v970 = vpop.f32.mrb[0].mxu0
    %v971 = vadd.f32 %v897, %v970
    %v972 = vpop.f32.mrb[0].mxu0
    %973 = vmatprep.mubr.f32.mxu0 0.0
    %974 = vmatmul.mubr.f32.gmra.mrb[0].mxu0 %v870
    %v975 = vpop.f32.mrb[0].mxu0
    %v976 = vadd.f32 %v897, %v975
    %v977 = vpop.f32.mrb[0].mxu0
    %978 = vmatprep.mubr.f32.mxu0 0.0
    %979 = vmatmul.mubr.f32.gmra.mrb[0].mxu0 %v871
    %v980 = vpop.f32.mrb[0].mxu0
    %v981 = vadd.f32 %v897, %v980
    %v982 = vpop.f32.mrb[0].mxu0
    %983 = vmatprep.mubr.f32.mxu0 0.0
    %984 = vmatmul.mubr.f32.gmra.mrb[0].mxu0 %v872
    %v985 = vpop.f32.mrb[0].mxu0
    %v986 = vadd.f32 %v897, %v985
    %v987 = vpop.f32.mrb[0].mxu0
    %988 = vmatprep.mubr.f32.mxu0 0.0
    %989 = vmatmul.mubr.f32.gmra.mrb[0].mxu0 %v873
    %v990 = vpop.f32.mrb[0].mxu0
    %v991 = vadd.f32 %v897, %v990
    %v992 = vpop.f32.mrb[0].mxu0
    %993 = vmatprep.mubr.f32.mxu0 0.0
    %994 = vmatmul.mubr.f32.gmra.mrb[0].mxu0 %v874
    %v995 = vpop.f32.mrb[0].mxu0
    %v996 = vadd.f32 %v897, %v995
    %v997 = vpop.f32.mrb[0].mxu0
    %998 = vmatprep.mubr.f32.mxu0 0.0
    %999 = vmatmul.mubr.f32.gmra.mrb[0].mxu0 %v875
    %v1000 = vpop.f32.mrb[0].mxu0
    %v1001 = vadd.f32 %v897, %v1000
    %v1002 = vpop.f32.mrb[0].mxu0
    %1003 = vdwg.mxu0
    %1004 = vst [vmem:[#allocation2] sm:$0xff] %v966
    %1005 = vst [vmem:[#allocation2 + $0x8] sm:$0xff] %v971
    %1006 = vst [vmem:[#allocation2 + $0x10] sm:$0xff] %v976
    %1007 = vst [vmem:[#allocation2 + $0x18] sm:$0xff] %v981
    %1008 = vst [vmem:[#allocation2 + $0x20] sm:$0xff] %v986
    %1009 = vst [vmem:[#allocation2 + $0x28] sm:$0xff] %v991
    %1010 = vst [vmem:[#allocation2 + $0x30] sm:$0xff] %v996
    %1011 = vst [vmem:[#allocation2 + $0x38] sm:$0xff] %v1001
    %v1012 = vld [vmem:[#allocation8] sm:$0xff]
    %v1013 = vld [vmem:[#allocation8 + $0x8] sm:$0xff]
    %v1014 = vld [vmem:[#allocation8 + $0x10] sm:$0xff]
    %v1015 = vld [vmem:[#allocation8 + $0x18] sm:$0xff]
    %v1016 = vld [vmem:[#allocation8 + $0x20] sm:$0xff]
    %v1017 = vld [vmem:[#allocation8 + $0x28] sm:$0xff]
    %v1018 = vld [vmem:[#allocation8 + $0x30] sm:$0xff]
    %v1019 = vld [vmem:[#allocation8 + $0x38] sm:$0xff]
    %v1020 = vld [vmem:[#allocation8 + $0x40] sm:$0xff]
    %v1021 = vld [vmem:[#allocation8 + $0x48] sm:$0xff]
    %v1022 = vld [vmem:[#allocation8 + $0x50] sm:$0xff]
    %v1023 = vld [vmem:[#allocation8 + $0x58] sm:$0xff]
    %v1024 = vld [vmem:[#allocation8 + $0x60] sm:$0xff]
    %v1025 = vld [vmem:[#allocation8 + $0x68] sm:$0xff]
    %v1026 = vld [vmem:[#allocation8 + $0x70] sm:$0xff]
    %v1027 = vld [vmem:[#allocation8 + $0x78] sm:$0xff]
    %s1028 = scalar_lea.vmem %s1, 8
    %v1029 = vld [vmem:[%s1028] sm:$0xff]
    %v1030 = vld [vmem:[#allocation2] sm:$0xff]
    %1031 = vmatprep.subr.mxu0 0.0
    %1032 = vmatpush1.msra.mxu0 %v1012
    %1033 = vmatprep.subr.mxu0 0.0
    %1034 = vmatpush1.msra.mxu0 %v1013
    %1035 = vmatprep.subr.mxu0 0.0
    %1036 = vmatpush1.msra.mxu0 %v1014
    %1037 = vmatprep.subr.mxu0 0.0
    %1038 = vmatpush1.msra.mxu0 %v1015
    %1039 = vmatprep.subr.mxu0 0.0
    %1040 = vmatpush1.msra.mxu0 %v1016
    %1041 = vmatprep.subr.mxu0 0.0
    %1042 = vmatpush1.msra.mxu0 %v1017
    %1043 = vmatprep.subr.mxu0 0.0
    %1044 = vmatpush1.msra.mxu0 %v1018
    %1045 = vmatprep.subr.mxu0 0.0
    %1046 = vmatpush1.msra.mxu0 %v1019
    %1047 = vmatprep.subr.mxu0 0.0
    %1048 = vmatpush1.msra.mxu0 %v1020
    %1049 = vmatprep.subr.mxu0 0.0
    %1050 = vmatpush1.msra.mxu0 %v1021
    %1051 = vmatprep.subr.mxu0 0.0
    %1052 = vmatpush1.msra.mxu0 %v1022
    %1053 = vmatprep.subr.mxu0 0.0
    %1054 = vmatpush1.msra.mxu0 %v1023
    %1055 = vmatprep.subr.mxu0 0.0
    %1056 = vmatpush1.msra.mxu0 %v1024
    %1057 = vmatprep.subr.mxu0 0.0
    %1058 = vmatpush1.msra.mxu0 %v1025
    %1059 = vmatprep.subr.mxu0 0.0
    %1060 = vmatpush1.msra.mxu0 %v1026
    %1061 = vmatprep.subr.mxu0 0.0
    %1062 = vmatpush1.msra.mxu0 %v1027
    %1063 = vmatprep.subr.mxu0 0.0
    %1064 = vmatpush1.msra.mxu0 0.0
    %1065 = vmatprep.subr.mxu0 0.0
    %1066 = vmatpush1.msra.mxu0 0.0
    %1067 = vmatprep.subr.mxu0 0.0
    %1068 = vmatpush1.msra.mxu0 0.0
    %1069 = vmatprep.subr.mxu0 0.0
    %1070 = vmatpush1.msra.mxu0 0.0
    %1071 = vmatprep.subr.mxu0 0.0
    %1072 = vmatpush1.msra.mxu0 0.0
    %1073 = vmatprep.subr.mxu0 0.0
    %1074 = vmatpush1.msra.mxu0 0.0
    %1075 = vmatprep.subr.mxu0 0.0
    %1076 = vmatpush1.msra.mxu0 0.0
    %1077 = vmatprep.subr.mxu0 0.0
    %1078 = vmatpush1.msra.mxu0 0.0
    %1079 = vmatprep.subr.mxu0 0.0
    %1080 = vmatpush1.msra.mxu0 0.0
    %1081 = vmatprep.subr.mxu0 0.0
    %1082 = vmatpush1.msra.mxu0 0.0
    %1083 = vmatprep.subr.mxu0 0.0
    %1084 = vmatpush1.msra.mxu0 0.0
    %1085 = vmatprep.subr.mxu0 0.0
    %1086 = vmatpush1.msra.mxu0 0.0
    %1087 = vmatprep.subr.mxu0 0.0
    %1088 = vmatpush1.msra.mxu0 0.0
    %1089 = vmatprep.subr.mxu0 0.0
    %1090 = vmatpush1.msra.mxu0 0.0
    %1091 = vmatprep.subr.mxu0 0.0
    %1092 = vmatpush1.msra.mxu0 0.0
    %1093 = vmatprep.subr.mxu0 0.0
    %1094 = vmatpush1.msra.mxu0 0.0
    %1095 = vmatprep.mubr.f32.mxu0 0.0
    %1096 = vmatmul.mubr.f32.gmra.mrb[0].mxu0 %v1029
    %v1097 = vpop.f32.mrb[0].mxu0
    %v1098 = vadd.f32 0.0, %v1097
    %v1099 = vpop.f32.mrb[0].mxu0
    %1100 = vdwg.mxu0
    %v1101 = vadd.f32 %v1030, %v1098
    %v1102 = vmax.f32 %v1101, 0.0
    %1103 = vst [vmem:[#allocation2] sm:$0xff] %v1102
    %v1104 = vld [vmem:[%s342] sm:$0xff]
    %1105 = vmatprep.subr.mxu0 0.0
    %1106 = vmatpush1.msra.mxu0 %v1012
    %1107 = vmatprep.subr.mxu0 0.0
    %1108 = vmatpush1.msra.mxu0 %v1013
    %1109 = vmatprep.subr.mxu0 0.0
    %1110 = vmatpush1.msra.mxu0 %v1014
    %1111 = vmatprep.subr.mxu0 0.0
    %1112 = vmatpush1.msra.mxu0 %v1015
    %1113 = vmatprep.subr.mxu0 0.0
    %1114 = vmatpush1.msra.mxu0 %v1016
    %1115 = vmatprep.subr.mxu0 0.0
    %1116 = vmatpush1.msra.mxu0 %v1017
    %1117 = vmatprep.subr.mxu0 0.0
    %1118 = vmatpush1.msra.mxu0 %v1018
    %1119 = vmatprep.subr.mxu0 0.0
    %1120 = vmatpush1.msra.mxu0 %v1019
    %1121 = vmatprep.subr.mxu0 0.0
    %1122 = vmatpush1.msra.mxu0 %v1020
    %1123 = vmatprep.subr.mxu0 0.0
    %1124 = vmatpush1.msra.mxu0 %v1021
    %1125 = vmatprep.subr.mxu0 0.0
    %1126 = vmatpush1.msra.mxu0 %v1022
    %1127 = vmatprep.subr.mxu0 0.0
    %1128 = vmatpush1.msra.mxu0 %v1023
    %1129 = vmatprep.subr.mxu0 0.0
    %1130 = vmatpush1.msra.mxu0 %v1024
    %1131 = vmatprep.subr.mxu0 0.0
    %1132 = vmatpush1.msra.mxu0 %v1025
    %1133 = vmatprep.subr.mxu0 0.0
    %1134 = vmatpush1.msra.mxu0 %v1026
    %1135 = vmatprep.subr.mxu0 0.0
    %1136 = vmatpush1.msra.mxu0 %v1027
    %1137 = vmatprep.subr.mxu0 0.0
    %1138 = vmatpush1.msra.mxu0 0.0
    %1139 = vmatprep.subr.mxu0 0.0
    %1140 = vmatpush1.msra.mxu0 0.0
    %1141 = vmatprep.subr.mxu0 0.0
    %1142 = vmatpush1.msra.mxu0 0.0
    %1143 = vmatprep.subr.mxu0 0.0
    %1144 = vmatpush1.msra.mxu0 0.0
    %1145 = vmatprep.subr.mxu0 0.0
    %1146 = vmatpush1.msra.mxu0 0.0
    %1147 = vmatprep.subr.mxu0 0.0
    %1148 = vmatpush1.msra.mxu0 0.0
    %1149 = vmatprep.subr.mxu0 0.0
    %1150 = vmatpush1.msra.mxu0 0.0
    %1151 = vmatprep.subr.mxu0 0.0
    %1152 = vmatpush1.msra.mxu0 0.0
    %1153 = vmatprep.subr.mxu0 0.0
    %1154 = vmatpush1.msra.mxu0 0.0
    %1155 = vmatprep.subr.mxu0 0.0
    %1156 = vmatpush1.msra.mxu0 0.0
    %1157 = vmatprep.subr.mxu0 0.0
    %1158 = vmatpush1.msra.mxu0 0.0
    %1159 = vmatprep.subr.mxu0 0.0
    %1160 = vmatpush1.msra.mxu0 0.0
    %1161 = vmatprep.subr.mxu0 0.0
    %1162 = vmatpush1.msra.mxu0 0.0
    %1163 = vmatprep.subr.mxu0 0.0
    %1164 = vmatpush1.msra.mxu0 0.0
    %1165 = vmatprep.subr.mxu0 0.0
    %1166 = vmatpush1.msra.mxu0 0.0
    %1167 = vmatprep.subr.mxu0 0.0
    %1168 = vmatpush1.msra.mxu0 0.0
    %1169 = vmatprep.mubr.f32.mxu0 0.0
    %1170 = vmatmul.mubr.f32.gmra.mrb[0].mxu0 %v1102
    %v1171 = vpop.f32.mrb[0].mxu0
    %v1172 = vadd.f32 0.0, %v1171
    %v1173 = vpop.f32.mrb[0].mxu0
    %1174 = vdwg.mxu0
    %v1175 = vadd.f32 %v1104, %v1172
    %v1176 = vmax.f32 %v1175, 0.0
    %1177 = vst [vmem:[%s342] sm:$0xff] %v1176
    %v1178 = vld [vmem:[%s417] sm:$0xff]
    %1179 = vmatprep.subr.mxu0 0.0
    %1180 = vmatpush1.msra.mxu0 %v1012
    %1181 = vmatprep.subr.mxu0 0.0
    %1182 = vmatpush1.msra.mxu0 %v1013
    %1183 = vmatprep.subr.mxu0 0.0
    %1184 = vmatpush1.msra.mxu0 %v1014
    %1185 = vmatprep.subr.mxu0 0.0
    %1186 = vmatpush1.msra.mxu0 %v1015
    %1187 = vmatprep.subr.mxu0 0.0
    %1188 = vmatpush1.msra.mxu0 %v1016
    %1189 = vmatprep.subr.mxu0 0.0
    %1190 = vmatpush1.msra.mxu0 %v1017
    %1191 = vmatprep.subr.mxu0 0.0
    %1192 = vmatpush1.msra.mxu0 %v1018
    %1193 = vmatprep.subr.mxu0 0.0
    %1194 = vmatpush1.msra.mxu0 %v1019
    %1195 = vmatprep.subr.mxu0 0.0
    %1196 = vmatpush1.msra.mxu0 %v1020
    %1197 = vmatprep.subr.mxu0 0.0
    %1198 = vmatpush1.msra.mxu0 %v1021
    %1199 = vmatprep.subr.mxu0 0.0
    %1200 = vmatpush1.msra.mxu0 %v1022
    %1201 = vmatprep.subr.mxu0 0.0
    %1202 = vmatpush1.msra.mxu0 %v1023
    %1203 = vmatprep.subr.mxu0 0.0
    %1204 = vmatpush1.msra.mxu0 %v1024
    %1205 = vmatprep.subr.mxu0 0.0
    %1206 = vmatpush1.msra.mxu0 %v1025
    %1207 = vmatprep.subr.mxu0 0.0
    %1208 = vmatpush1.msra.mxu0 %v1026
    %1209 = vmatprep.subr.mxu0 0.0
    %1210 = vmatpush1.msra.mxu0 %v1027
    %1211 = vmatprep.subr.mxu0 0.0
    %1212 = vmatpush1.msra.mxu0 0.0
    %1213 = vmatprep.subr.mxu0 0.0
    %1214 = vmatpush1.msra.mxu0 0.0
    %1215 = vmatprep.subr.mxu0 0.0
    %1216 = vmatpush1.msra.mxu0 0.0
    %1217 = vmatprep.subr.mxu0 0.0
    %1218 = vmatpush1.msra.mxu0 0.0
    %1219 = vmatprep.subr.mxu0 0.0
    %1220 = vmatpush1.msra.mxu0 0.0
    %1221 = vmatprep.subr.mxu0 0.0
    %1222 = vmatpush1.msra.mxu0 0.0
    %1223 = vmatprep.subr.mxu0 0.0
    %1224 = vmatpush1.msra.mxu0 0.0
    %1225 = vmatprep.subr.mxu0 0.0
    %1226 = vmatpush1.msra.mxu0 0.0
    %1227 = vmatprep.subr.mxu0 0.0
    %1228 = vmatpush1.msra.mxu0 0.0
    %1229 = vmatprep.subr.mxu0 0.0
    %1230 = vmatpush1.msra.mxu0 0.0
    %1231 = vmatprep.subr.mxu0 0.0
    %1232 = vmatpush1.msra.mxu0 0.0
    %1233 = vmatprep.subr.mxu0 0.0
    %1234 = vmatpush1.msra.mxu0 0.0
    %1235 = vmatprep.subr.mxu0 0.0
    %1236 = vmatpush1.msra.mxu0 0.0
    %1237 = vmatprep.subr.mxu0 0.0
    %1238 = vmatpush1.msra.mxu0 0.0
    %1239 = vmatprep.subr.mxu0 0.0
    %1240 = vmatpush1.msra.mxu0 0.0
    %1241 = vmatprep.subr.mxu0 0.0
    %1242 = vmatpush1.msra.mxu0 0.0
    %1243 = vmatprep.mubr.f32.mxu0 0.0
    %1244 = vmatmul.mubr.f32.gmra.mrb[0].mxu0 %v1176
    %v1245 = vpop.f32.mrb[0].mxu0
    %v1246 = vadd.f32 0.0, %v1245
    %v1247 = vpop.f32.mrb[0].mxu0
    %1248 = vdwg.mxu0
    %v1249 = vadd.f32 %v1178, %v1246
    %v1250 = vmax.f32 %v1249, 0.0
    %1251 = vst [vmem:[%s417] sm:$0xff] %v1250
    %v1252 = vld [vmem:[%s492] sm:$0xff]
    %1253 = vmatprep.subr.mxu0 0.0
    %1254 = vmatpush1.msra.mxu0 %v1012
    %1255 = vmatprep.subr.mxu0 0.0
    %1256 = vmatpush1.msra.mxu0 %v1013
    %1257 = vmatprep.subr.mxu0 0.0
    %1258 = vmatpush1.msra.mxu0 %v1014
    %1259 = vmatprep.subr.mxu0 0.0
    %1260 = vmatpush1.msra.mxu0 %v1015
    %1261 = vmatprep.subr.mxu0 0.0
    %1262 = vmatpush1.msra.mxu0 %v1016
    %1263 = vmatprep.subr.mxu0 0.0
    %1264 = vmatpush1.msra.mxu0 %v1017
    %1265 = vmatprep.subr.mxu0 0.0
    %1266 = vmatpush1.msra.mxu0 %v1018
    %1267 = vmatprep.subr.mxu0 0.0
    %1268 = vmatpush1.msra.mxu0 %v1019
    %1269 = vmatprep.subr.mxu0 0.0
    %1270 = vmatpush1.msra.mxu0 %v1020
    %1271 = vmatprep.subr.mxu0 0.0
    %1272 = vmatpush1.msra.mxu0 %v1021
    %1273 = vmatprep.subr.mxu0 0.0
    %1274 = vmatpush1.msra.mxu0 %v1022
    %1275 = vmatprep.subr.mxu0 0.0
    %1276 = vmatpush1.msra.mxu0 %v1023
    %1277 = vmatprep.subr.mxu0 0.0
    %1278 = vmatpush1.msra.mxu0 %v1024
    %1279 = vmatprep.subr.mxu0 0.0
    %1280 = vmatpush1.msra.mxu0 %v1025
    %1281 = vmatprep.subr.mxu0 0.0
    %1282 = vmatpush1.msra.mxu0 %v1026
    %1283 = vmatprep.subr.mxu0 0.0
    %1284 = vmatpush1.msra.mxu0 %v1027
    %1285 = vmatprep.subr.mxu0 0.0
    %1286 = vmatpush1.msra.mxu0 0.0
    %1287 = vmatprep.subr.mxu0 0.0
    %1288 = vmatpush1.msra.mxu0 0.0
    %1289 = vmatprep.subr.mxu0 0.0
    %1290 = vmatpush1.msra.mxu0 0.0
    %1291 = vmatprep.subr.mxu0 0.0
    %1292 = vmatpush1.msra.mxu0 0.0
    %1293 = vmatprep.subr.mxu0 0.0
    %1294 = vmatpush1.msra.mxu0 0.0
    %1295 = vmatprep.subr.mxu0 0.0
    %1296 = vmatpush1.msra.mxu0 0.0
    %1297 = vmatprep.subr.mxu0 0.0
    %1298 = vmatpush1.msra.mxu0 0.0
    %1299 = vmatprep.subr.mxu0 0.0
    %1300 = vmatpush1.msra.mxu0 0.0
    %1301 = vmatprep.subr.mxu0 0.0
    %1302 = vmatpush1.msra.mxu0 0.0
    %1303 = vmatprep.subr.mxu0 0.0
    %1304 = vmatpush1.msra.mxu0 0.0
    %1305 = vmatprep.subr.mxu0 0.0
    %1306 = vmatpush1.msra.mxu0 0.0
    %1307 = vmatprep.subr.mxu0 0.0
    %1308 = vmatpush1.msra.mxu0 0.0
    %1309 = vmatprep.subr.mxu0 0.0
    %1310 = vmatpush1.msra.mxu0 0.0
    %1311 = vmatprep.subr.mxu0 0.0
    %1312 = vmatpush1.msra.mxu0 0.0
    %1313 = vmatprep.subr.mxu0 0.0
    %1314 = vmatpush1.msra.mxu0 0.0
    %1315 = vmatprep.subr.mxu0 0.0
    %1316 = vmatpush1.msra.mxu0 0.0
    %1317 = vmatprep.mubr.f32.mxu0 0.0
    %1318 = vmatmul.mubr.f32.gmra.mrb[0].mxu0 %v1250
    %v1319 = vpop.f32.mrb[0].mxu0
    %v1320 = vadd.f32 0.0, %v1319
    %v1321 = vpop.f32.mrb[0].mxu0
    %1322 = vdwg.mxu0
    %v1323 = vadd.f32 %v1252, %v1320
    %v1324 = vmax.f32 %v1323, 0.0
    %1325 = vst [vmem:[%s492] sm:$0xff] %v1324
    %v1326 = vld [vmem:[%s567] sm:$0xff]
    %1327 = vmatprep.subr.mxu0 0.0
    %1328 = vmatpush1.msra.mxu0 %v1012
    %1329 = vmatprep.subr.mxu0 0.0
    %1330 = vmatpush1.msra.mxu0 %v1013
    %1331 = vmatprep.subr.mxu0 0.0
    %1332 = vmatpush1.msra.mxu0 %v1014
    %1333 = vmatprep.subr.mxu0 0.0
    %1334 = vmatpush1.msra.mxu0 %v1015
    %1335 = vmatprep.subr.mxu0 0.0
    %1336 = vmatpush1.msra.mxu0 %v1016
    %1337 = vmatprep.subr.mxu0 0.0
    %1338 = vmatpush1.msra.mxu0 %v1017
    %1339 = vmatprep.subr.mxu0 0.0
    %1340 = vmatpush1.msra.mxu0 %v1018
    %1341 = vmatprep.subr.mxu0 0.0
    %1342 = vmatpush1.msra.mxu0 %v1019
    %1343 = vmatprep.subr.mxu0 0.0
    %1344 = vmatpush1.msra.mxu0 %v1020
    %1345 = vmatprep.subr.mxu0 0.0
    %1346 = vmatpush1.msra.mxu0 %v1021
    %1347 = vmatprep.subr.mxu0 0.0
    %1348 = vmatpush1.msra.mxu0 %v1022
    %1349 = vmatprep.subr.mxu0 0.0
    %1350 = vmatpush1.msra.mxu0 %v1023
    %1351 = vmatprep.subr.mxu0 0.0
    %1352 = vmatpush1.msra.mxu0 %v1024
    %1353 = vmatprep.subr.mxu0 0.0
    %1354 = vmatpush1.msra.mxu0 %v1025
    %1355 = vmatprep.subr.mxu0 0.0
    %1356 = vmatpush1.msra.mxu0 %v1026
    %1357 = vmatprep.subr.mxu0 0.0
    %1358 = vmatpush1.msra.mxu0 %v1027
    %1359 = vmatprep.subr.mxu0 0.0
    %1360 = vmatpush1.msra.mxu0 0.0
    %1361 = vmatprep.subr.mxu0 0.0
    %1362 = vmatpush1.msra.mxu0 0.0
    %1363 = vmatprep.subr.mxu0 0.0
    %1364 = vmatpush1.msra.mxu0 0.0
    %1365 = vmatprep.subr.mxu0 0.0
    %1366 = vmatpush1.msra.mxu0 0.0
    %1367 = vmatprep.subr.mxu0 0.0
    %1368 = vmatpush1.msra.mxu0 0.0
    %1369 = vmatprep.subr.mxu0 0.0
    %1370 = vmatpush1.msra.mxu0 0.0
    %1371 = vmatprep.subr.mxu0 0.0
    %1372 = vmatpush1.msra.mxu0 0.0
    %1373 = vmatprep.subr.mxu0 0.0
    %1374 = vmatpush1.msra.mxu0 0.0
    %1375 = vmatprep.subr.mxu0 0.0
    %1376 = vmatpush1.msra.mxu0 0.0
    %1377 = vmatprep.subr.mxu0 0.0
    %1378 = vmatpush1.msra.mxu0 0.0
    %1379 = vmatprep.subr.mxu0 0.0
    %1380 = vmatpush1.msra.mxu0 0.0
    %1381 = vmatprep.subr.mxu0 0.0
    %1382 = vmatpush1.msra.mxu0 0.0
    %1383 = vmatprep.subr.mxu0 0.0
    %1384 = vmatpush1.msra.mxu0 0.0
    %1385 = vmatprep.subr.mxu0 0.0
    %1386 = vmatpush1.msra.mxu0 0.0
    %1387 = vmatprep.subr.mxu0 0.0
    %1388 = vmatpush1.msra.mxu0 0.0
    %1389 = vmatprep.subr.mxu0 0.0
    %1390 = vmatpush1.msra.mxu0 0.0
    %1391 = vmatprep.mubr.f32.mxu0 0.0
    %1392 = vmatmul.mubr.f32.gmra.mrb[0].mxu0 %v1324
    %v1393 = vpop.f32.mrb[0].mxu0
    %v1394 = vadd.f32 0.0, %v1393
    %v1395 = vpop.f32.mrb[0].mxu0
    %1396 = vdwg.mxu0
    %v1397 = vadd.f32 %v1326, %v1394
    %v1398 = vmax.f32 %v1397, 0.0
    %1399 = vst [vmem:[%s567] sm:$0xff] %v1398
    %v1400 = vld [vmem:[%s642] sm:$0xff]
    %1401 = vmatprep.subr.mxu0 0.0
    %1402 = vmatpush1.msra.mxu0 %v1012
    %1403 = vmatprep.subr.mxu0 0.0
    %1404 = vmatpush1.msra.mxu0 %v1013
    %1405 = vmatprep.subr.mxu0 0.0
    %1406 = vmatpush1.msra.mxu0 %v1014
    %1407 = vmatprep.subr.mxu0 0.0
    %1408 = vmatpush1.msra.mxu0 %v1015
    %1409 = vmatprep.subr.mxu0 0.0
    %1410 = vmatpush1.msra.mxu0 %v1016
    %1411 = vmatprep.subr.mxu0 0.0
    %1412 = vmatpush1.msra.mxu0 %v1017
    %1413 = vmatprep.subr.mxu0 0.0
    %1414 = vmatpush1.msra.mxu0 %v1018
    %1415 = vmatprep.subr.mxu0 0.0
    %1416 = vmatpush1.msra.mxu0 %v1019
    %1417 = vmatprep.subr.mxu0 0.0
    %1418 = vmatpush1.msra.mxu0 %v1020
    %1419 = vmatprep.subr.mxu0 0.0
    %1420 = vmatpush1.msra.mxu0 %v1021
    %1421 = vmatprep.subr.mxu0 0.0
    %1422 = vmatpush1.msra.mxu0 %v1022
    %1423 = vmatprep.subr.mxu0 0.0
    %1424 = vmatpush1.msra.mxu0 %v1023
    %1425 = vmatprep.subr.mxu0 0.0
    %1426 = vmatpush1.msra.mxu0 %v1024
    %1427 = vmatprep.subr.mxu0 0.0
    %1428 = vmatpush1.msra.mxu0 %v1025
    %1429 = vmatprep.subr.mxu0 0.0
    %1430 = vmatpush1.msra.mxu0 %v1026
    %1431 = vmatprep.subr.mxu0 0.0
    %1432 = vmatpush1.msra.mxu0 %v1027
    %1433 = vmatprep.subr.mxu0 0.0
    %1434 = vmatpush1.msra.mxu0 0.0
    %1435 = vmatprep.subr.mxu0 0.0
    %1436 = vmatpush1.msra.mxu0 0.0
    %1437 = vmatprep.subr.mxu0 0.0
    %1438 = vmatpush1.msra.mxu0 0.0
    %1439 = vmatprep.subr.mxu0 0.0
    %1440 = vmatpush1.msra.mxu0 0.0
    %1441 = vmatprep.subr.mxu0 0.0
    %1442 = vmatpush1.msra.mxu0 0.0
    %1443 = vmatprep.subr.mxu0 0.0
    %1444 = vmatpush1.msra.mxu0 0.0
    %1445 = vmatprep.subr.mxu0 0.0
    %1446 = vmatpush1.msra.mxu0 0.0
    %1447 = vmatprep.subr.mxu0 0.0
    %1448 = vmatpush1.msra.mxu0 0.0
    %1449 = vmatprep.subr.mxu0 0.0
    %1450 = vmatpush1.msra.mxu0 0.0
    %1451 = vmatprep.subr.mxu0 0.0
    %1452 = vmatpush1.msra.mxu0 0.0
    %1453 = vmatprep.subr.mxu0 0.0
    %1454 = vmatpush1.msra.mxu0 0.0
    %1455 = vmatprep.subr.mxu0 0.0
    %1456 = vmatpush1.msra.mxu0 0.0
    %1457 = vmatprep.subr.mxu0 0.0
    %1458 = vmatpush1.msra.mxu0 0.0
    %1459 = vmatprep.subr.mxu0 0.0
    %1460 = vmatpush1.msra.mxu0 0.0
    %1461 = vmatprep.subr.mxu0 0.0
    %1462 = vmatpush1.msra.mxu0 0.0
    %1463 = vmatprep.subr.mxu0 0.0
    %1464 = vmatpush1.msra.mxu0 0.0
    %1465 = vmatprep.mubr.f32.mxu0 0.0
    %1466 = vmatmul.mubr.f32.gmra.mrb[0].mxu0 %v1398
    %v1467 = vpop.f32.mrb[0].mxu0
    %v1468 = vadd.f32 0.0, %v1467
    %v1469 = vpop.f32.mrb[0].mxu0
    %1470 = vdwg.mxu0
    %v1471 = vadd.f32 %v1400, %v1468
    %v1472 = vmax.f32 %v1471, 0.0
    %1473 = vst [vmem:[%s642] sm:$0xff] %v1472
    %v1474 = vld [vmem:[%s717] sm:$0xff]
    %1475 = vmatprep.subr.mxu0 0.0
    %1476 = vmatpush1.msra.mxu0 %v1012
    %1477 = vmatprep.subr.mxu0 0.0
    %1478 = vmatpush1.msra.mxu0 %v1013
    %1479 = vmatprep.subr.mxu0 0.0
    %1480 = vmatpush1.msra.mxu0 %v1014
    %1481 = vmatprep.subr.mxu0 0.0
    %1482 = vmatpush1.msra.mxu0 %v1015
    %1483 = vmatprep.subr.mxu0 0.0
    %1484 = vmatpush1.msra.mxu0 %v1016
    %1485 = vmatprep.subr.mxu0 0.0
    %1486 = vmatpush1.msra.mxu0 %v1017
    %1487 = vmatprep.subr.mxu0 0.0
    %1488 = vmatpush1.msra.mxu0 %v1018
    %1489 = vmatprep.subr.mxu0 0.0
    %1490 = vmatpush1.msra.mxu0 %v1019
    %1491 = vmatprep.subr.mxu0 0.0
    %1492 = vmatpush1.msra.mxu0 %v1020
    %1493 = vmatprep.subr.mxu0 0.0
    %1494 = vmatpush1.msra.mxu0 %v1021
    %1495 = vmatprep.subr.mxu0 0.0
    %1496 = vmatpush1.msra.mxu0 %v1022
    %1497 = vmatprep.subr.mxu0 0.0
    %1498 = vmatpush1.msra.mxu0 %v1023
    %1499 = vmatprep.subr.mxu0 0.0
    %1500 = vmatpush1.msra.mxu0 %v1024
    %1501 = vmatprep.subr.mxu0 0.0
    %1502 = vmatpush1.msra.mxu0 %v1025
    %1503 = vmatprep.subr.mxu0 0.0
    %1504 = vmatpush1.msra.mxu0 %v1026
    %1505 = vmatprep.subr.mxu0 0.0
    %1506 = vmatpush1.msra.mxu0 %v1027
    %1507 = vmatprep.subr.mxu0 0.0
    %1508 = vmatpush1.msra.mxu0 0.0
    %1509 = vmatprep.subr.mxu0 0.0
    %1510 = vmatpush1.msra.mxu0 0.0
    %1511 = vmatprep.subr.mxu0 0.0
    %1512 = vmatpush1.msra.mxu0 0.0
    %1513 = vmatprep.subr.mxu0 0.0
    %1514 = vmatpush1.msra.mxu0 0.0
    %1515 = vmatprep.subr.mxu0 0.0
    %1516 = vmatpush1.msra.mxu0 0.0
    %1517 = vmatprep.subr.mxu0 0.0
    %1518 = vmatpush1.msra.mxu0 0.0
    %1519 = vmatprep.subr.mxu0 0.0
    %1520 = vmatpush1.msra.mxu0 0.0
    %1521 = vmatprep.subr.mxu0 0.0
    %1522 = vmatpush1.msra.mxu0 0.0
    %1523 = vmatprep.subr.mxu0 0.0
    %1524 = vmatpush1.msra.mxu0 0.0
    %1525 = vmatprep.subr.mxu0 0.0
    %1526 = vmatpush1.msra.mxu0 0.0
    %1527 = vmatprep.subr.mxu0 0.0
    %1528 = vmatpush1.msra.mxu0 0.0
    %1529 = vmatprep.subr.mxu0 0.0
    %1530 = vmatpush1.msra.mxu0 0.0
    %1531 = vmatprep.subr.mxu0 0.0
    %1532 = vmatpush1.msra.mxu0 0.0
    %1533 = vmatprep.subr.mxu0 0.0
    %1534 = vmatpush1.msra.mxu0 0.0
    %1535 = vmatprep.subr.mxu0 0.0
    %1536 = vmatpush1.msra.mxu0 0.0
    %1537 = vmatprep.subr.mxu0 0.0
    %1538 = vmatpush1.msra.mxu0 0.0
    %1539 = vmatprep.mubr.f32.mxu0 0.0
    %1540 = vmatmul.mubr.f32.gmra.mrb[0].mxu0 %v1472
    %v1541 = vpop.f32.mrb[0].mxu0
    %v1542 = vadd.f32 0.0, %v1541
    %v1543 = vpop.f32.mrb[0].mxu0
    %1544 = vdwg.mxu0
    %v1545 = vadd.f32 %v1474, %v1542
    %v1546 = vmax.f32 %v1545, 0.0
    %1547 = vst [vmem:[%s717] sm:$0xff] %v1546
    %v1548 = vld [vmem:[%s792] sm:$0xff]
    %1549 = vmatprep.subr.mxu0 0.0
    %1550 = vmatpush1.msra.mxu0 %v1012
    %1551 = vmatprep.subr.mxu0 0.0
    %1552 = vmatpush1.msra.mxu0 %v1013
    %1553 = vmatprep.subr.mxu0 0.0
    %1554 = vmatpush1.msra.mxu0 %v1014
    %1555 = vmatprep.subr.mxu0 0.0
    %1556 = vmatpush1.msra.mxu0 %v1015
    %1557 = vmatprep.subr.mxu0 0.0
    %1558 = vmatpush1.msra.mxu0 %v1016
    %1559 = vmatprep.subr.mxu0 0.0
    %1560 = vmatpush1.msra.mxu0 %v1017
    %1561 = vmatprep.subr.mxu0 0.0
    %1562 = vmatpush1.msra.mxu0 %v1018
    %1563 = vmatprep.subr.mxu0 0.0
    %1564 = vmatpush1.msra.mxu0 %v1019
    %1565 = vmatprep.subr.mxu0 0.0
    %1566 = vmatpush1.msra.mxu0 %v1020
    %1567 = vmatprep.subr.mxu0 0.0
    %1568 = vmatpush1.msra.mxu0 %v1021
    %1569 = vmatprep.subr.mxu0 0.0
    %1570 = vmatpush1.msra.mxu0 %v1022
    %1571 = vmatprep.subr.mxu0 0.0
    %1572 = vmatpush1.msra.mxu0 %v1023
    %1573 = vmatprep.subr.mxu0 0.0
    %1574 = vmatpush1.msra.mxu0 %v1024
    %1575 = vmatprep.subr.mxu0 0.0
    %1576 = vmatpush1.msra.mxu0 %v1025
    %1577 = vmatprep.subr.mxu0 0.0
    %1578 = vmatpush1.msra.mxu0 %v1026
    %1579 = vmatprep.subr.mxu0 0.0
    %1580 = vmatpush1.msra.mxu0 %v1027
    %1581 = vmatprep.subr.mxu0 0.0
    %1582 = vmatpush1.msra.mxu0 0.0
    %1583 = vmatprep.subr.mxu0 0.0
    %1584 = vmatpush1.msra.mxu0 0.0
    %1585 = vmatprep.subr.mxu0 0.0
    %1586 = vmatpush1.msra.mxu0 0.0
    %1587 = vmatprep.subr.mxu0 0.0
    %1588 = vmatpush1.msra.mxu0 0.0
    %1589 = vmatprep.subr.mxu0 0.0
    %1590 = vmatpush1.msra.mxu0 0.0
    %1591 = vmatprep.subr.mxu0 0.0
    %1592 = vmatpush1.msra.mxu0 0.0
    %1593 = vmatprep.subr.mxu0 0.0
    %1594 = vmatpush1.msra.mxu0 0.0
    %1595 = vmatprep.subr.mxu0 0.0
    %1596 = vmatpush1.msra.mxu0 0.0
    %1597 = vmatprep.subr.mxu0 0.0
    %1598 = vmatpush1.msra.mxu0 0.0
    %1599 = vmatprep.subr.mxu0 0.0
    %1600 = vmatpush1.msra.mxu0 0.0
    %1601 = vmatprep.subr.mxu0 0.0
    %1602 = vmatpush1.msra.mxu0 0.0
    %1603 = vmatprep.subr.mxu0 0.0
    %1604 = vmatpush1.msra.mxu0 0.0
    %1605 = vmatprep.subr.mxu0 0.0
    %1606 = vmatpush1.msra.mxu0 0.0
    %1607 = vmatprep.subr.mxu0 0.0
    %1608 = vmatpush1.msra.mxu0 0.0
    %1609 = vmatprep.subr.mxu0 0.0
    %1610 = vmatpush1.msra.mxu0 0.0
    %1611 = vmatprep.subr.mxu0 0.0
    %1612 = vmatpush1.msra.mxu0 0.0
    %1613 = vmatprep.mubr.f32.mxu0 0.0
    %1614 = vmatmul.mubr.f32.gmra.mrb[0].mxu0 %v1546
    %v1615 = vpop.f32.mrb[0].mxu0
    %v1616 = vadd.f32 0.0, %v1615
    %v1617 = vpop.f32.mrb[0].mxu0
    %1618 = vdwg.mxu0
    %v1619 = vadd.f32 %v1548, %v1616
    %v1620 = vmax.f32 %v1619, 0.0
    %1621 = vst [vmem:[%s792] sm:$0xff] %v1620
    %s1622 = scalar_lea.vmem [#allocation12], 8
    %1623 = vst [vmem:[%s1622] sm:$0xff] %v1620
    %v1624 = vld [vmem:[#allocation2] sm:$0xff]
    %v1625 = vld [vmem:[#allocation2 + $0x8] sm:$0xff]
    %v1626 = vld [vmem:[#allocation2 + $0x10] sm:$0xff]
    %v1627 = vld [vmem:[#allocation2 + $0x18] sm:$0xff]
    %v1628 = vld [vmem:[#allocation2 + $0x20] sm:$0xff]
    %v1629 = vld [vmem:[#allocation2 + $0x28] sm:$0xff]
    %v1630 = vld [vmem:[#allocation2 + $0x30] sm:$0xff]
    %v1631 = vld [vmem:[#allocation2 + $0x38] sm:$0xff]
    %v1632 = vld [vmem:[#allocation9] sm:$0xff]
    %v1633 = vld [vmem:[#allocation9 + $0x8] sm:$0xff]
    %v1634 = vld [vmem:[#allocation9 + $0x10] sm:$0xff]
    %v1635 = vld [vmem:[#allocation9 + $0x18] sm:$0xff]
    %v1636 = vld [vmem:[#allocation9 + $0x20] sm:$0xff]
    %v1637 = vld [vmem:[#allocation9 + $0x28] sm:$0xff]
    %v1638 = vld [vmem:[#allocation9 + $0x30] sm:$0xff]
    %v1639 = vld [vmem:[#allocation9 + $0x38] sm:$0xff]
    %v1640 = vld [vmem:[#allocation9 + $0x40] sm:$0xff]
    %v1641 = vld [vmem:[#allocation9 + $0x48] sm:$0xff]
    %v1642 = vld [vmem:[#allocation9 + $0x50] sm:$0xff]
    %v1643 = vld [vmem:[#allocation9 + $0x58] sm:$0xff]
    %v1644 = vld [vmem:[#allocation9 + $0x60] sm:$0xff]
    %v1645 = vld [vmem:[#allocation9 + $0x68] sm:$0xff]
    %v1646 = vld [vmem:[#allocation9 + $0x70] sm:$0xff]
    %v1647 = vld [vmem:[#allocation9 + $0x78] sm:$0xff]
    %v1648 = vld [vmem:[%s9] sm:$0x1]
    %v1650 = vlaneseq
    %v1651 = vshrl.u32 %v1650, 7
    %v1652 = vsub.s32 0, %v1651
    %v1653 = vrot.slane %v1648, %v1652
    %1655 = vmatprep.subr.mxu0 0.0
    %1656 = vmatpush1.msra.mxu0 %v1632
    %1657 = vmatprep.subr.mxu0 0.0
    %1658 = vmatpush1.msra.mxu0 %v1633
    %1659 = vmatprep.subr.mxu0 0.0
    %1660 = vmatpush1.msra.mxu0 %v1634
    %1661 = vmatprep.subr.mxu0 0.0
    %1662 = vmatpush1.msra.mxu0 %v1635
    %1663 = vmatprep.subr.mxu0 0.0
    %1664 = vmatpush1.msra.mxu0 %v1636
    %1665 = vmatprep.subr.mxu0 0.0
    %1666 = vmatpush1.msra.mxu0 %v1637
    %1667 = vmatprep.subr.mxu0 0.0
    %1668 = vmatpush1.msra.mxu0 %v1638
    %1669 = vmatprep.subr.mxu0 0.0
    %1670 = vmatpush1.msra.mxu0 %v1639
    %1671 = vmatprep.subr.mxu0 0.0
    %1672 = vmatpush1.msra.mxu0 %v1640
    %1673 = vmatprep.subr.mxu0 0.0
    %1674 = vmatpush1.msra.mxu0 %v1641
    %1675 = vmatprep.subr.mxu0 0.0
    %1676 = vmatpush1.msra.mxu0 %v1642
    %1677 = vmatprep.subr.mxu0 0.0
    %1678 = vmatpush1.msra.mxu0 %v1643
    %1679 = vmatprep.subr.mxu0 0.0
    %1680 = vmatpush1.msra.mxu0 %v1644
    %1681 = vmatprep.subr.mxu0 0.0
    %1682 = vmatpush1.msra.mxu0 %v1645
    %1683 = vmatprep.subr.mxu0 0.0
    %1684 = vmatpush1.msra.mxu0 %v1646
    %1685 = vmatprep.subr.mxu0 0.0
    %1686 = vmatpush1.msra.mxu0 %v1647
    %1687 = vmatprep.subr.mxu0 0.0
    %1688 = vmatpush1.msra.mxu0 0.0
    %1689 = vmatprep.subr.mxu0 0.0
    %1690 = vmatpush1.msra.mxu0 0.0
    %1691 = vmatprep.subr.mxu0 0.0
    %1692 = vmatpush1.msra.mxu0 0.0
    %1693 = vmatprep.subr.mxu0 0.0
    %1694 = vmatpush1.msra.mxu0 0.0
    %1695 = vmatprep.subr.mxu0 0.0
    %1696 = vmatpush1.msra.mxu0 0.0
    %1697 = vmatprep.subr.mxu0 0.0
    %1698 = vmatpush1.msra.mxu0 0.0
    %1699 = vmatprep.subr.mxu0 0.0
    %1700 = vmatpush1.msra.mxu0 0.0
    %1701 = vmatprep.subr.mxu0 0.0
    %1702 = vmatpush1.msra.mxu0 0.0
    %1703 = vmatprep.subr.mxu0 0.0
    %1704 = vmatpush1.msra.mxu0 0.0
    %1705 = vmatprep.subr.mxu0 0.0
    %1706 = vmatpush1.msra.mxu0 0.0
    %1707 = vmatprep.subr.mxu0 0.0
    %1708 = vmatpush1.msra.mxu0 0.0
    %1709 = vmatprep.subr.mxu0 0.0
    %1710 = vmatpush1.msra.mxu0 0.0
    %1711 = vmatprep.subr.mxu0 0.0
    %1712 = vmatpush1.msra.mxu0 0.0
    %1713 = vmatprep.subr.mxu0 0.0
    %1714 = vmatpush1.msra.mxu0 0.0
    %1715 = vmatprep.subr.mxu0 0.0
    %1716 = vmatpush1.msra.mxu0 0.0
    %1717 = vmatprep.subr.mxu0 0.0
    %1718 = vmatpush1.msra.mxu0 0.0
    %1719 = vmatprep.mubr.f32.mxu0 0.0
    %1720 = vmatmul.mubr.f32.gmra.mrb[0].mxu0 %v1624
    %v1721 = vpop.f32.mrb[0].mxu0
    %v1722 = vadd.f32 %v1653, %v1721
    %v1723 = vpop.f32.mrb[0].mxu0
    %1724 = vmatprep.mubr.f32.mxu0 0.0
    %1725 = vmatmul.mubr.f32.gmra.mrb[0].mxu0 %v1625
    %v1726 = vpop.f32.mrb[0].mxu0
    %v1727 = vadd.f32 %v1653, %v1726
    %v1728 = vpop.f32.mrb[0].mxu0
    %1729 = vmatprep.mubr.f32.mxu0 0.0
    %1730 = vmatmul.mubr.f32.gmra.mrb[0].mxu0 %v1626
    %v1731 = vpop.f32.mrb[0].mxu0
    %v1732 = vadd.f32 %v1653, %v1731
    %v1733 = vpop.f32.mrb[0].mxu0
    %1734 = vmatprep.mubr.f32.mxu0 0.0
    %1735 = vmatmul.mubr.f32.gmra.mrb[0].mxu0 %v1627
    %v1736 = vpop.f32.mrb[0].mxu0
    %v1737 = vadd.f32 %v1653, %v1736
    %v1738 = vpop.f32.mrb[0].mxu0
    %1739 = vmatprep.mubr.f32.mxu0 0.0
    %1740 = vmatmul.mubr.f32.gmra.mrb[0].mxu0 %v1628
    %v1741 = vpop.f32.mrb[0].mxu0
    %v1742 = vadd.f32 %v1653, %v1741
    %v1743 = vpop.f32.mrb[0].mxu0
    %1744 = vmatprep.mubr.f32.mxu0 0.0
    %1745 = vmatmul.mubr.f32.gmra.mrb[0].mxu0 %v1629
    %v1746 = vpop.f32.mrb[0].mxu0
    %v1747 = vadd.f32 %v1653, %v1746
    %v1748 = vpop.f32.mrb[0].mxu0
    %1749 = vmatprep.mubr.f32.mxu0 0.0
    %1750 = vmatmul.mubr.f32.gmra.mrb[0].mxu0 %v1630
    %v1751 = vpop.f32.mrb[0].mxu0
    %v1752 = vadd.f32 %v1653, %v1751
    %v1753 = vpop.f32.mrb[0].mxu0
    %1754 = vmatprep.mubr.f32.mxu0 0.0
    %1755 = vmatmul.mubr.f32.gmra.mrb[0].mxu0 %v1631
    %v1756 = vpop.f32.mrb[0].mxu0
    %v1757 = vadd.f32 %v1653, %v1756
    %v1758 = vpop.f32.mrb[0].mxu0
    %1759 = vdwg.mxu0
    %1760 = vst [vmem:[#allocation11] sm:$0xff] %v1722
    %1761 = vst [vmem:[#allocation11 + $0x8] sm:$0xff] %v1727
    %1762 = vst [vmem:[#allocation11 + $0x10] sm:$0xff] %v1732
    %1763 = vst [vmem:[#allocation11 + $0x18] sm:$0xff] %v1737
    %1764 = vst [vmem:[#allocation11 + $0x20] sm:$0xff] %v1742
    %1765 = vst [vmem:[#allocation11 + $0x28] sm:$0xff] %v1747
    %1766 = vst [vmem:[#allocation11 + $0x30] sm:$0xff] %v1752
    %1767 = vst [vmem:[#allocation11 + $0x38] sm:$0xff] %v1757
    // Predicated region
    $region58: #{tpu_custom_call.1} parent=1 // pred_check
      _
    $region59: #{tpu_custom_call.1} parent=1 // pred_check_branch
      %1769 = sbr.rel (0) target = $region61
    $region60: #{tpu_custom_call.1} parent=1 // pred_region
      %s1771 = ssub.s32 1024, 1024
      %1772 = vsyncadd [#allocation5], %s1771
      %s1773 = sshll.u32 [#allocation11], 4
      %s1774 = int_to_ptr.vmem [resolvable:$true] %s1773
      %1779 = dma.vmem_to_hbm [thread:$0]  %s1774, 1024, %s10, [#allocation5], 128, 128, 8
    $region61: #{tpu_custom_call.1} parent=1 // pred_fallthru
      _
    // Predicated region
    $region62: #{tpu_custom_call.1} parent=1 // pred_check
      _
    $region63: #{tpu_custom_call.1} parent=1 // pred_check_branch
      %1781 = sbr.rel (0) target = $region65
    $region64: #{tpu_custom_call.1} parent=1 // pred_region
      %s1783 = ssub.s32 256, 256
      %1784 = vsyncadd [#allocation13], %s1783
      %s1785 = sshll.u32 [#allocation12], 4
      %s1786 = int_to_ptr.vmem [resolvable:$true] %s1785
      %1791 = dma.vmem_to_hbm [thread:$0]  %s1786, 256, %s11, [#allocation13], 128, 128, 8
    $region65: #{tpu_custom_call.1} parent=1 // pred_fallthru
      _
    // Predicated region
    $region66: #{tpu_custom_call.1} parent=1 // pred_check
      _
    $region67: #{tpu_custom_call.1} parent=1 // pred_check_branch
      %1793 = sbr.rel (0) target = $region69
    $region68: #{tpu_custom_call.1} parent=1 // pred_region
      %1794 = dma.done [#allocation5], 1024
    $region69: #{tpu_custom_call.1} parent=1 // pred_fallthru
      _
    // Predicated region
    $region70: #{tpu_custom_call.1} parent=1 // pred_check
      _
    $region71: #{tpu_custom_call.1} parent=1 // pred_check_branch
      %1796 = sbr.rel (0) target = $region73
    $region72: #{tpu_custom_call.1} parent=1 // pred_region
      %1797 = dma.done [#allocation13], 256
    $region73: #{tpu_custom_call.1} parent=1 // pred_fallthru
      _
    %1798 = vsyncpa [#allocation4], 1
    %1799 = vsyncpa [#allocation7], 1
    %1800 = vsyncpa [#allocation10], 1
    %1801 = vsyncpa [#allocation5], 1
    %1802 = vsyncpa [#allocation13], 1

</llo_original>
